<compile_context>
chip_gen: v5e
topology: v5e:2x2
jax: 0.10.0
libtpu: 0.0.40
codegen_flags: <defaults>
</compile_context>

<pallas_src>
import functools

import numpy as np
import jax
import jax.numpy as jnp
from jax.experimental import pallas as pl
from jax.experimental.pallas import tpu as pltpu

PAD = 0  # Constants.PAD


# ----------------------------------------------------------------------------
# Parameter / table construction (plain JAX / numpy glue)
# ----------------------------------------------------------------------------
def get_sinusoid_encoding_table(n_position, d_hid, padding_idx=None):
    def cal_angle(position, hid_idx):
        return position / np.power(10000, 2 * (hid_idx // 2) / d_hid)

    def get_posi_angle_vec(position):
        return [cal_angle(position, hid_j) for hid_j in range(d_hid)]

    table = np.array([get_posi_angle_vec(p) for p in range(n_position)])
    table[:, 0::2] = np.sin(table[:, 0::2])
    table[:, 1::2] = np.cos(table[:, 1::2])
    if padding_idx is not None:
        table[padding_idx] = 0.0
    return jnp.asarray(table, dtype=jnp.float32)


def init_params(key, n_vocab, d_model, n_layers, n_head, d_k, d_v, d_inner, ks):
    assert d_k == d_v, "fused QKV layout assumes d_k == d_v"
    assert n_head * d_k == d_model, "d_k must equal d_model // n_head"
    k1, k2 = ks
    keys = jax.random.split(key, 1 + n_layers)
    scale = 0.02
    emb = scale * jax.random.normal(keys[0], (n_vocab, d_model), jnp.float32)
    emb = emb.at[PAD].set(0.0)  # nn.Embedding padding_idx row is zero

    maxw = max(3 * n_head * d_k, d_inner, d_model)

    def row(v):  # zero-pad a 1-D vector to the packed width
        return jnp.pad(v, (0, maxw - v.shape[0]))

    wqkv_l, wo_l, w1_l, w2_l, vec_l = [], [], [], [], []
    for li in range(n_layers):
        kl = jax.random.split(keys[1 + li], 8)
        nrm = lambda k_, shape: scale * jax.random.normal(k_, shape, jnp.float32)
        wqkv = nrm(kl[0], (d_model, 3 * n_head * d_k))     # flat (D, 3H*dk)
        wo = nrm(kl[1], (n_head * d_v, d_model))           # (H*dv, D)
        w1 = nrm(kl[2], (k1, d_model, d_inner))            # per-tap conv1 weights
        w2 = nrm(kl[3], (k2, d_inner, d_model))            # per-tap conv2 weights
        bqkv = nrm(kl[4], (3 * n_head * d_k,))
        bo = nrm(kl[5], (d_model,))
        b1 = nrm(kl[6], (d_inner,))
        b2 = nrm(kl[7], (d_model,))
        g1 = jnp.ones((d_model,), jnp.float32)
        be1 = jnp.zeros((d_model,), jnp.float32)
        g2 = jnp.ones((d_model,), jnp.float32)
        be2 = jnp.zeros((d_model,), jnp.float32)

        # Packed small per-layer vectors: one DMA instead of 8.
        vec = jnp.stack([row(bqkv), row(bo), row(g1), row(be1),
                         row(b1), row(b2), row(g2), row(be2)], axis=0)  # (8, maxw)

        wqkv_l.append(wqkv.astype(jnp.bfloat16))
        wo_l.append(wo.astype(jnp.bfloat16))
        w1_l.append(w1.astype(jnp.bfloat16))
        w2_l.append(w2.astype(jnp.bfloat16))
        vec_l.append(vec)

    params = {'wqkv': jnp.stack(wqkv_l), 'wo': jnp.stack(wo_l),
              'w1': jnp.stack(w1_l), 'w2': jnp.stack(w2_l),
              'vec': jnp.stack(vec_l)}
    return emb, params


# ----------------------------------------------------------------------------
# Fused Pallas kernel: all FFT blocks + positional add, one batch row / step
# ----------------------------------------------------------------------------
def _layer_norm(x, gamma, beta, eps=1e-5):
    mean = jnp.mean(x, axis=-1, keepdims=True)
    var = jnp.mean(jnp.square(x - mean), axis=-1, keepdims=True)
    return (x - mean) * jax.lax.rsqrt(var + eps) * gamma + beta


def encoder_kernel(lens_ref,                                   # SMEM (B,) prefetch
                   emb_ref, pos_ref,
                   wqkv_ref, wo_ref, w1_ref, w2_ref, vec_ref,
                   out_ref, *, n_head, d_k, d_v, k1, k2, n_layers):
    b = pl.program_id(0)
    _, S, D = out_ref.shape
    H = n_head
    d_inner = w1_ref.shape[-1]

    # Padding masks built in-kernel from the prefetched sequence length (SMEM).
    length = lens_ref[b]
    col_ids = jax.lax.broadcasted_iota(jnp.int32, (1, S), 1)
    key_bias = jnp.where(col_ids >= length, jnp.float32(-1e9), jnp.float32(0.0))  # (1,S)
    row_ids = jax.lax.broadcasted_iota(jnp.int32, (S, 1), 0)
    q_keep = (row_ids < length).astype(jnp.float32)                               # (S,1)

    # Embedding + positional encoding; activation carried as a value across layers.
    x = emb_ref[0] + pos_ref[...]                              # (S, D) f32
    inv_temp = jnp.float32(1.0 / float(np.sqrt(d_k)))

    # Static unroll over layers (L is small); weight block indices are constant
    # across the grid, so the weights are DMA'd once per core and reused here.
    for l in range(n_layers):
        vecs = vec_ref[l]                                      # (8, maxw) packed f32
        bqkv = vecs[0:1, 0:3 * H * d_k]
        bo   = vecs[1:2, 0:D]
        g1   = vecs[2:3, 0:D]
        be1  = vecs[3:4, 0:D]
        b1   = vecs[4:5, 0:d_inner]
        b2   = vecs[5:6, 0:D]
        g2   = vecs[6:7, 0:D]
        be2  = vecs[7:8, 0:D]

        # ---------------- multi-head self-attention ----------------
        x_bf = x.astype(jnp.bfloat16)
        # Single lane-dense MXU matmul for Q, K, V (no activation broadcast).
        qkv = jnp.dot(x_bf, wqkv_ref[l],
                      preferred_element_type=jnp.float32) + bqkv        # (S, 3H*dk)

        ctx_heads = []
        for h in range(H):                                     # H is small (2)
            q_h = qkv[:, h * d_k:(h + 1) * d_k]
            k_h = qkv[:, (H + h) * d_k:(H + h + 1) * d_k]
            v_h = qkv[:, (2 * H + h) * d_k:(2 * H + h + 1) * d_k]
            s_h = jnp.dot(q_h.astype(jnp.bfloat16), k_h.T.astype(jnp.bfloat16),
                          preferred_element_type=jnp.float32) * inv_temp  # (S, S)
            s_h = s_h + key_bias                               # masked_fill(mask, -inf)
            m = jnp.max(s_h, axis=-1, keepdims=True)
            p = jnp.exp(s_h - m)
            denom = jnp.sum(p, axis=-1, keepdims=True)
            p = p * pl.reciprocal(denom, approx=True)          # softmax (EUP recip)
            ctx_heads.append(jnp.dot(p.astype(jnp.bfloat16), v_h.astype(jnp.bfloat16),
                                     preferred_element_type=jnp.float32))  # (S, dv)
        ctx = ctx_heads[0] if H == 1 else jnp.concatenate(ctx_heads, axis=-1)  # (S, H*dv)

        # Single output projection (contraction K = H*dv, fused head-sum).
        attn = jnp.dot(ctx.astype(jnp.bfloat16), wo_ref[l],
                       preferred_element_type=jnp.float32) + bo          # (S, D)
        attn = _layer_norm(attn + x, g1, be1)
        attn = attn * q_keep                                   # masked_fill(mask, 0)

        # ---------- position-wise conv FFN: k shifted matmuls, f32 accumulator ----------
        pad1 = (k1 - 1) // 2
        if pad1 > 0:
            z1 = jnp.zeros((pad1, D), jnp.float32)
            xp = jnp.concatenate([z1, attn, z1], axis=0).astype(jnp.bfloat16)
        else:
            xp = attn.astype(jnp.bfloat16)
        h1 = jnp.dot(xp[0:S, :], w1_ref[l, 0], preferred_element_type=jnp.float32)
        for j in range(1, k1):
            h1 = h1 + jnp.dot(xp[j:j + S, :], w1_ref[l, j],
                              preferred_element_type=jnp.float32)
        h1 = jnp.maximum(h1 + b1, 0.0)                         # bias + ReLU

        pad2 = (k2 - 1) // 2
        if pad2 > 0:
            z2 = jnp.zeros((pad2, d_inner), jnp.float32)
            hp = jnp.concatenate([z2, h1, z2], axis=0).astype(jnp.bfloat16)
        else:
            hp = h1.astype(jnp.bfloat16)
        ffn = jnp.dot(hp[0:S, :], w2_ref[l, 0], preferred_element_type=jnp.float32)
        for j in range(1, k2):
            ffn = ffn + jnp.dot(hp[j:j + S, :], w2_ref[l, j],
                                preferred_element_type=jnp.float32)
        ffn = ffn + b2

        x = _layer_norm(ffn + attn, g2, be2) * q_keep          # masked_fill(mask, 0)

    out_ref[0] = x                                             # single HBM writeback


# ----------------------------------------------------------------------------
# Wrapper: one pallas_call for the whole encoder
# ----------------------------------------------------------------------------
def _pick_vmem_limit():
    # v5e/v6e: 128 MiB physical (default scoped limit 16/32 MiB); v7x: 64 MiB/TC.
    try:
        phys = pltpu.get_tpu_info().vmem_capacity_bytes
        return min(int(phys * 0.85), 110 * 1024 * 1024)
    except Exception:
        return 48 * 1024 * 1024                                # safe everywhere


def encoder_forward(src_seq, mask, emb_table, pos_table, params, cfg):
    B, S = src_seq.shape
    D = emb_table.shape[1]
    L = params['wqkv'].shape[0]

    # TODO(synk): token-embedding gather kept in plain JAX (data-dependent
    # gather); a scalar-prefetch / pl.Element row-gather could fuse this too.
    emb = jnp.take(emb_table, src_seq, axis=0)                 # (B, S, D)
    pos = pos_table[:S, :]                                     # (S, D)

    # Suffix-padding assumption (standard FastSpeech2 text input): mask is True
    # exactly at positions >= length. Assert it (skipped when traced under jit).
    src_lens = jnp.sum(jnp.logical_not(mask), axis=1).astype(jnp.int32)   # (B,)
    try:
        suffix = jnp.arange(S, dtype=jnp.int32)[None, :] >= src_lens[:, None]
        ok = bool(jnp.all(suffix == mask))
    except Exception:
        ok = True
    assert ok, "padding mask must be suffix-contiguous (True exactly at t >= length)"

    weights = [params['wqkv'], params['wo'], params['w1'], params['w2'], params['vec']]

    def full_spec(arr):
        # Constant block index -> each core DMAs this weight exactly once.
        nd = arr.ndim
        return pl.BlockSpec(arr.shape, lambda b, lens, _nd=nd: (0,) * _nd)

    in_specs = ([pl.BlockSpec((1, S, D), lambda b, lens: (b, 0, 0)),   # emb row
                 pl.BlockSpec((S, D), lambda b, lens: (0, 0))]         # pos table
                + [full_spec(w) for w in weights])

    kern = functools.partial(encoder_kernel,
                             n_head=cfg['n_head'], d_k=cfg['d_k'], d_v=cfg['d_v'],
                             k1=cfg['ks'][0], k2=cfg['ks'][1], n_layers=L)

    grid_spec = pltpu.PrefetchScalarGridSpec(
        num_scalar_prefetch=1,                 # src_lens -> SMEM
        grid=(B,),                             # batch only; layers looped in-kernel
        in_specs=in_specs,
        out_specs=pl.BlockSpec((1, S, D), lambda b, lens: (b, 0, 0)),
    )
    return pl.pallas_call(
        kern,
        out_shape=jax.ShapeDtypeStruct((B, S, D), jnp.float32),
        grid_spec=grid_spec,
        compiler_params=pltpu.CompilerParams(
            dimension_semantics=("parallel",),   # megacore sharding over batch
            vmem_limit_bytes=_pick_vmem_limit()),
    )(src_lens, emb, pos, *weights)


# ----------------------------------------------------------------------------
# Pure-JAX f32 reference (mirrors the PyTorch Encoder forward), for tolerance test
# ----------------------------------------------------------------------------
def encoder_reference(src_seq, mask, emb_table, pos_table, params, cfg):
    B, S = src_seq.shape
    D = emb_table.shape[1]
    H, dk = cfg['n_head'], cfg['d_k']
    k1, k2 = cfg['ks']
    d_inner = params['w1'].shape[-1]
    x = jnp.take(emb_table, src_seq, axis=0) + pos_table[:S][None]
    key_mask = mask[:, None, :]                                 # (B,1,S)
    q_mask = jnp.logical_not(mask)[:, :, None].astype(jnp.float32)
    L = params['wqkv'].shape[0]
    for l in range(L):
        vec = params['vec'][l]
        bqkv, bo = vec[0, :3 * H * dk], vec[1, :D]
        g1, be1 = vec[2, :D], vec[3, :D]
        b1, b2 = vec[4, :d_inner], vec[5, :D]
        g2, be2 = vec[6, :D], vec[7, :D]
        wqkv = params['wqkv'][l].astype(jnp.float32)
        wo = params['wo'][l].astype(jnp.float32)
        w1 = params['w1'][l].astype(jnp.float32)
        w2 = params['w2'][l].astype(jnp.float32)
        qkv = x @ wqkv + bqkv
        ctxs = []
        for h in range(H):
            q = qkv[..., h * dk:(h + 1) * dk]
            k = qkv[..., (H + h) * dk:(H + h + 1) * dk]
            v = qkv[..., (2 * H + h) * dk:(2 * H + h + 1) * dk]
            s = jnp.einsum('bqd,bkd->bqk', q, k) / np.sqrt(dk)
            s = jnp.where(key_mask, -1e9, s)
            p = jax.nn.softmax(s, axis=-1)
            ctxs.append(jnp.einsum('bqk,bkd->bqd', p, v))
        ctx = jnp.concatenate(ctxs, axis=-1)
        attn = _layer_norm(ctx @ wo + bo + 0.0 * x, g1, be1) if False else None
        attn = _layer_norm((ctx @ wo + bo) + x, g1, be1) * q_mask
        pad1 = (k1 - 1) // 2
        xp = jnp.pad(attn, ((0, 0), (pad1, pad1), (0, 0)))
        h1 = sum(xp[:, j:j + S] @ w1[j] for j in range(k1)) + b1
        h1 = jnp.maximum(h1, 0.0)
        pad2 = (k2 - 1) // 2
        hp = jnp.pad(h1, ((0, 0), (pad2, pad2), (0, 0)))
        ffn = sum(hp[:, j:j + S] @ w2[j] for j in range(k2)) + b2
        x = _layer_norm(ffn + attn, g2, be2) * q_mask
    return x


# ----------------------------------------------------------------------------
if __name__ == "__main__":
    symbols = list("abcdefghij")                # synthetic symbol set
    config = {
        'max_seq_len': 32,
        'transformer': {
            'encoder_hidden': 32,
            'encoder_layer': 2,
            'encoder_head': 2,
            'conv_filter_size': 64,
            'conv_kernel_size': [9, 1],
            'encoder_dropout': 0.2,             # eval mode -> identity
        },
    }
    d_model = config['transformer']['encoder_hidden']
    n_layers = config['transformer']['encoder_layer']
    n_head = config['transformer']['encoder_head']
    d_k = d_v = d_model // n_head
    d_inner = config['transformer']['conv_filter_size']
    ks = tuple(config['transformer']['conv_kernel_size'])
    n_vocab = len(symbols) + 1

    B, S = 2, 16
    key = jax.random.PRNGKey(0)
    k_tok, k_par = jax.random.split(key)

    src = jax.random.randint(k_tok, (B, S), 1, n_vocab, dtype=jnp.int32)
    lens = jnp.array([S, S - 5], dtype=jnp.int32)
    pad_positions = jnp.arange(S)[None, :] >= lens[:, None]
    src = jnp.where(pad_positions, PAD, src)
    mask = (src == PAD)                          # True at padded positions

    emb_table, params = init_params(k_par, n_vocab, d_model, n_layers,
                                    n_head, d_k, d_v, d_inner, ks)
    pos_table = get_sinusoid_encoding_table(config['max_seq_len'] + 1, d_model)

    cfg = dict(n_head=n_head, d_k=d_k, d_v=d_v, ks=ks)
    out = encoder_forward(src, mask, emb_table, pos_table, params, cfg)
    jax.block_until_ready(out)
    assert out.shape == (B, S, d_model)
    assert bool(jnp.all(jnp.isfinite(out)))

    # Tolerance check vs. pure-JAX f32 reference (bf16 matmuls + approx recip).
    ref = encoder_reference(src, mask, emb_table, pos_table, params, cfg)
    max_err = float(jnp.max(jnp.abs(out - ref)))
    assert max_err < 0.2, f"kernel deviates from reference: max|diff|={max_err}"

    print("KERNEL_OK")
</pallas_src>

<mosaic_0001>
module attributes {stable_mosaic.version = 11 : i64} {
  func.func @encoder_kernel(%arg0: i32, %arg1: memref<2xi32, #tpu.memory_space<smem>>, %arg2: memref<1x16x32xf32, #tpu.memory_space<vmem>>, %arg3: memref<16x32xf32, #tpu.memory_space<vmem>>, %arg4: memref<2x32x96xbf16, #tpu.memory_space<vmem>>, %arg5: memref<2x32x32xbf16, #tpu.memory_space<vmem>>, %arg6: memref<2x9x32x64xbf16, #tpu.memory_space<vmem>>, %arg7: memref<2x1x64x32xbf16, #tpu.memory_space<vmem>>, %arg8: memref<2x8x96xf32, #tpu.memory_space<vmem>>, %arg9: memref<1x16x32xf32, #tpu.memory_space<vmem>>) attributes {dimension_semantics = [#tpu.dimension_semantics<parallel>], iteration_bounds = array<i64: 2>, scalar_prefetch = 1 : i64, scratch_operands = 0 : i64, tpu.core_type = #tpu.core_type<tc>, window_params = [{transform_indices = @transform_0, window_bounds = array<i64: 1, 16, 32>}, {pipeline_mode = #tpu.pipeline_mode<synchronous>, transform_indices = @transform_1, window_bounds = array<i64: 16, 32>}, {pipeline_mode = #tpu.pipeline_mode<synchronous>, transform_indices = @transform_2, window_bounds = array<i64: 2, 32, 96>}, {pipeline_mode = #tpu.pipeline_mode<synchronous>, transform_indices = @transform_3, window_bounds = array<i64: 2, 32, 32>}, {pipeline_mode = #tpu.pipeline_mode<synchronous>, transform_indices = @transform_4, window_bounds = array<i64: 2, 9, 32, 64>}, {pipeline_mode = #tpu.pipeline_mode<synchronous>, transform_indices = @transform_5, window_bounds = array<i64: 2, 1, 64, 32>}, {pipeline_mode = #tpu.pipeline_mode<synchronous>, transform_indices = @transform_6, window_bounds = array<i64: 2, 8, 96>}, {transform_indices = @transform_7, window_bounds = array<i64: 1, 16, 32>}]} {
    %0 = arith.index_cast %arg0 : i32 to index
    %1 = memref.load %arg1[%0] : memref<2xi32, #tpu.memory_space<smem>>
    %2 = tpu.iota {dimensions = array<i32: 1>} : vector<1x16xi32>
    %3 = vector.broadcast %1 : i32 to vector<1x16xi32>
    %4 = arith.cmpi sge, %2, %3 : vector<1x16xi32>
    %cst = arith.constant -1.000000e+09 : f32
    %cst_0 = arith.constant 0.000000e+00 : f32
    %5 = vector.broadcast %cst : f32 to vector<1x16xf32>
    %6 = vector.broadcast %cst_0 : f32 to vector<1x16xf32>
    %7 = arith.select %4, %5, %6 : vector<1x16xi1>, vector<1x16xf32>
    %8 = tpu.iota {dimensions = array<i32: 0>} : vector<16x1xi32>
    %9 = vector.broadcast %1 : i32 to vector<16x1xi32>
    %10 = arith.cmpi slt, %8, %9 : vector<16x1xi32>
    %11 = arith.extui %10 : vector<16x1xi1> to vector<16x1xi32>
    %12 = arith.sitofp %11 : vector<16x1xi32> to vector<16x1xf32>
    %c0 = arith.constant 0 : index
    %c0_1 = arith.constant 0 : index
    %c0_2 = arith.constant 0 : index
    %13 = vector.load %arg2[%c0, %c0_1, %c0_2] : memref<1x16x32xf32, #tpu.memory_space<vmem>>, vector<1x16x32xf32>
    %14 = vector.shape_cast %13 : vector<1x16x32xf32> to vector<16x32xf32>
    %c0_3 = arith.constant 0 : index
    %c0_4 = arith.constant 0 : index
    %15 = vector.load %arg3[%c0_3, %c0_4] : memref<16x32xf32, #tpu.memory_space<vmem>>, vector<16x32xf32>
    %16 = arith.addf %14, %15 : vector<16x32xf32>
    %c0_5 = arith.constant 0 : index
    %c0_6 = arith.constant 0 : index
    %c0_7 = arith.constant 0 : index
    %17 = vector.load %arg8[%c0_5, %c0_6, %c0_7] : memref<2x8x96xf32, #tpu.memory_space<vmem>>, vector<1x8x96xf32>
    %18 = vector.shape_cast %17 : vector<1x8x96xf32> to vector<8x96xf32>
    %19 = vector.extract_strided_slice %18 {offsets = [0, 0], sizes = [1, 96], strides = [1, 1]} : vector<8x96xf32> to vector<1x96xf32>
    %20 = vector.extract_strided_slice %18 {offsets = [1, 0], sizes = [1, 32], strides = [1, 1]} : vector<8x96xf32> to vector<1x32xf32>
    %21 = vector.extract_strided_slice %18 {offsets = [2, 0], sizes = [1, 32], strides = [1, 1]} : vector<8x96xf32> to vector<1x32xf32>
    %22 = vector.extract_strided_slice %18 {offsets = [3, 0], sizes = [1, 32], strides = [1, 1]} : vector<8x96xf32> to vector<1x32xf32>
    %23 = vector.extract_strided_slice %18 {offsets = [4, 0], sizes = [1, 64], strides = [1, 1]} : vector<8x96xf32> to vector<1x64xf32>
    %24 = vector.extract_strided_slice %18 {offsets = [5, 0], sizes = [1, 32], strides = [1, 1]} : vector<8x96xf32> to vector<1x32xf32>
    %25 = vector.extract_strided_slice %18 {offsets = [6, 0], sizes = [1, 32], strides = [1, 1]} : vector<8x96xf32> to vector<1x32xf32>
    %26 = vector.extract_strided_slice %18 {offsets = [7, 0], sizes = [1, 32], strides = [1, 1]} : vector<8x96xf32> to vector<1x32xf32>
    %27 = arith.truncf %16 : vector<16x32xf32> to vector<16x32xbf16>
    %c0_8 = arith.constant 0 : index
    %c0_9 = arith.constant 0 : index
    %c0_10 = arith.constant 0 : index
    %28 = vector.load %arg4[%c0_8, %c0_9, %c0_10] : memref<2x32x96xbf16, #tpu.memory_space<vmem>>, vector<1x32x96xbf16>
    %29 = vector.shape_cast %28 : vector<1x32x96xbf16> to vector<32x96xbf16>
    %cst_11 = arith.constant dense<0.000000e+00> : vector<16x96xf32>
    %30 = tpu.matmul %27, %29, %cst_11 {dimension_numbers = #tpu.dot_dimension_numbers<[1], [0], [0], [1], [0, 0, 1, 1], [], []>} : vector<16x32xbf16>, vector<32x96xbf16>, vector<16x96xf32> -> vector<16x96xf32>
    %31 = vector.broadcast %19 : vector<1x96xf32> to vector<16x96xf32>
    %32 = arith.addf %30, %31 : vector<16x96xf32>
    %33 = vector.extract_strided_slice %32 {offsets = [0, 0], sizes = [16, 16], strides = [1, 1]} : vector<16x96xf32> to vector<16x16xf32>
    %34 = vector.extract_strided_slice %32 {offsets = [0, 32], sizes = [16, 16], strides = [1, 1]} : vector<16x96xf32> to vector<16x16xf32>
    %35 = vector.extract_strided_slice %32 {offsets = [0, 64], sizes = [16, 16], strides = [1, 1]} : vector<16x96xf32> to vector<16x16xf32>
    %36 = arith.truncf %33 : vector<16x16xf32> to vector<16x16xbf16>
    %37 = tpu.transpose %34, [1, 0] : vector<16x16xf32> -> vector<16x16xf32>
    %38 = arith.truncf %37 : vector<16x16xf32> to vector<16x16xbf16>
    %cst_12 = arith.constant dense<0.000000e+00> : vector<16x16xf32>
    %39 = tpu.matmul %36, %38, %cst_12 {dimension_numbers = #tpu.dot_dimension_numbers<[1], [0], [0], [1], [0, 0, 1, 1], [], []>} : vector<16x16xbf16>, vector<16x16xbf16>, vector<16x16xf32> -> vector<16x16xf32>
    %cst_13 = arith.constant 2.500000e-01 : f32
    %40 = vector.broadcast %cst_13 : f32 to vector<16x16xf32>
    %41 = arith.mulf %39, %40 : vector<16x16xf32>
    %42 = vector.broadcast %7 : vector<1x16xf32> to vector<16x16xf32>
    %43 = arith.addf %41, %42 : vector<16x16xf32>
    %cst_14 = arith.constant dense<0xFF800000> : vector<16xf32>
    %44 = vector.multi_reduction <maximumf>, %43, %cst_14 [1] : vector<16x16xf32> to vector<16xf32>
    %45 = vector.shape_cast %44 : vector<16xf32> to vector<16x1xf32>
    %46 = vector.broadcast %45 : vector<16x1xf32> to vector<16x16xf32>
    %47 = arith.subf %43, %46 : vector<16x16xf32>
    %48 = math.exp %47 : vector<16x16xf32>
    %cst_15 = arith.constant dense<0.000000e+00> : vector<16xf32>
    %49 = vector.multi_reduction <add>, %48, %cst_15 [1] : vector<16x16xf32> to vector<16xf32>
    %50 = vector.shape_cast %49 : vector<16xf32> to vector<16x1xf32>
    %51 = tpu.reciprocal %50 {approx = true} : vector<16x1xf32> -> vector<16x1xf32>
    %52 = vector.broadcast %51 : vector<16x1xf32> to vector<16x16xf32>
    %53 = arith.mulf %48, %52 : vector<16x16xf32>
    %54 = arith.truncf %53 : vector<16x16xf32> to vector<16x16xbf16>
    %55 = arith.truncf %35 : vector<16x16xf32> to vector<16x16xbf16>
    %cst_16 = arith.constant dense<0.000000e+00> : vector<16x16xf32>
    %56 = tpu.matmul %54, %55, %cst_16 {dimension_numbers = #tpu.dot_dimension_numbers<[1], [0], [0], [1], [0, 0, 1, 1], [], []>} : vector<16x16xbf16>, vector<16x16xbf16>, vector<16x16xf32> -> vector<16x16xf32>
    %57 = vector.extract_strided_slice %32 {offsets = [0, 16], sizes = [16, 16], strides = [1, 1]} : vector<16x96xf32> to vector<16x16xf32>
    %58 = vector.extract_strided_slice %32 {offsets = [0, 48], sizes = [16, 16], strides = [1, 1]} : vector<16x96xf32> to vector<16x16xf32>
    %59 = vector.extract_strided_slice %32 {offsets = [0, 80], sizes = [16, 16], strides = [1, 1]} : vector<16x96xf32> to vector<16x16xf32>
    %60 = arith.truncf %57 : vector<16x16xf32> to vector<16x16xbf16>
    %61 = tpu.transpose %58, [1, 0] : vector<16x16xf32> -> vector<16x16xf32>
    %62 = arith.truncf %61 : vector<16x16xf32> to vector<16x16xbf16>
    %cst_17 = arith.constant dense<0.000000e+00> : vector<16x16xf32>
    %63 = tpu.matmul %60, %62, %cst_17 {dimension_numbers = #tpu.dot_dimension_numbers<[1], [0], [0], [1], [0, 0, 1, 1], [], []>} : vector<16x16xbf16>, vector<16x16xbf16>, vector<16x16xf32> -> vector<16x16xf32>
    %cst_18 = arith.constant 2.500000e-01 : f32
    %64 = vector.broadcast %cst_18 : f32 to vector<16x16xf32>
    %65 = arith.mulf %63, %64 : vector<16x16xf32>
    %66 = vector.broadcast %7 : vector<1x16xf32> to vector<16x16xf32>
    %67 = arith.addf %65, %66 : vector<16x16xf32>
    %cst_19 = arith.constant dense<0xFF800000> : vector<16xf32>
    %68 = vector.multi_reduction <maximumf>, %67, %cst_19 [1] : vector<16x16xf32> to vector<16xf32>
    %69 = vector.shape_cast %68 : vector<16xf32> to vector<16x1xf32>
    %70 = vector.broadcast %69 : vector<16x1xf32> to vector<16x16xf32>
    %71 = arith.subf %67, %70 : vector<16x16xf32>
    %72 = math.exp %71 : vector<16x16xf32>
    %cst_20 = arith.constant dense<0.000000e+00> : vector<16xf32>
    %73 = vector.multi_reduction <add>, %72, %cst_20 [1] : vector<16x16xf32> to vector<16xf32>
    %74 = vector.shape_cast %73 : vector<16xf32> to vector<16x1xf32>
    %75 = tpu.reciprocal %74 {approx = true} : vector<16x1xf32> -> vector<16x1xf32>
    %76 = vector.broadcast %75 : vector<16x1xf32> to vector<16x16xf32>
    %77 = arith.mulf %72, %76 : vector<16x16xf32>
    %78 = arith.truncf %77 : vector<16x16xf32> to vector<16x16xbf16>
    %79 = arith.truncf %59 : vector<16x16xf32> to vector<16x16xbf16>
    %cst_21 = arith.constant dense<0.000000e+00> : vector<16x16xf32>
    %80 = tpu.matmul %78, %79, %cst_21 {dimension_numbers = #tpu.dot_dimension_numbers<[1], [0], [0], [1], [0, 0, 1, 1], [], []>} : vector<16x16xbf16>, vector<16x16xbf16>, vector<16x16xf32> -> vector<16x16xf32>
    %81 = tpu.concatenate %56, %80 in 1 : vector<16x16xf32>, vector<16x16xf32> -> vector<16x32xf32>
    %82 = arith.truncf %81 : vector<16x32xf32> to vector<16x32xbf16>
    %c0_22 = arith.constant 0 : index
    %c0_23 = arith.constant 0 : index
    %c0_24 = arith.constant 0 : index
    %83 = vector.load %arg5[%c0_22, %c0_23, %c0_24] : memref<2x32x32xbf16, #tpu.memory_space<vmem>>, vector<1x32x32xbf16>
    %84 = vector.shape_cast %83 : vector<1x32x32xbf16> to vector<32x32xbf16>
    %cst_25 = arith.constant dense<0.000000e+00> : vector<16x32xf32>
    %85 = tpu.matmul %82, %84, %cst_25 {dimension_numbers = #tpu.dot_dimension_numbers<[1], [0], [0], [1], [0, 0, 1, 1], [], []>} : vector<16x32xbf16>, vector<32x32xbf16>, vector<16x32xf32> -> vector<16x32xf32>
    %86 = vector.broadcast %20 : vector<1x32xf32> to vector<16x32xf32>
    %87 = arith.addf %85, %86 : vector<16x32xf32>
    %88 = arith.addf %87, %16 : vector<16x32xf32>
    %cst_26 = arith.constant dense<0.000000e+00> : vector<16xf32>
    %89 = vector.multi_reduction <add>, %88, %cst_26 [1] : vector<16x32xf32> to vector<16xf32>
    %90 = vector.shape_cast %89 : vector<16xf32> to vector<16x1xf32>
    %cst_27 = arith.constant 3.200000e+01 : f32
    %91 = vector.broadcast %cst_27 : f32 to vector<16x1xf32>
    %92 = arith.divf %90, %91 : vector<16x1xf32>
    %93 = vector.broadcast %92 : vector<16x1xf32> to vector<16x32xf32>
    %94 = arith.subf %88, %93 : vector<16x32xf32>
    %95 = arith.mulf %94, %94 : vector<16x32xf32>
    %cst_28 = arith.constant dense<0.000000e+00> : vector<16xf32>
    %96 = vector.multi_reduction <add>, %95, %cst_28 [1] : vector<16x32xf32> to vector<16xf32>
    %97 = vector.shape_cast %96 : vector<16xf32> to vector<16x1xf32>
    %cst_29 = arith.constant 3.200000e+01 : f32
    %98 = vector.broadcast %cst_29 : f32 to vector<16x1xf32>
    %99 = arith.divf %97, %98 : vector<16x1xf32>
    %100 = vector.broadcast %92 : vector<16x1xf32> to vector<16x32xf32>
    %101 = arith.subf %88, %100 : vector<16x32xf32>
    %cst_30 = arith.constant 9.99999974E-6 : f32
    %102 = vector.broadcast %cst_30 : f32 to vector<16x1xf32>
    %103 = arith.addf %99, %102 : vector<16x1xf32>
    %104 = math.rsqrt %103 : vector<16x1xf32>
    %105 = vector.broadcast %104 : vector<16x1xf32> to vector<16x32xf32>
    %106 = arith.mulf %101, %105 : vector<16x32xf32>
    %107 = vector.broadcast %21 : vector<1x32xf32> to vector<16x32xf32>
    %108 = arith.mulf %106, %107 : vector<16x32xf32>
    %109 = vector.broadcast %22 : vector<1x32xf32> to vector<16x32xf32>
    %110 = arith.addf %108, %109 : vector<16x32xf32>
    %111 = vector.broadcast %12 : vector<16x1xf32> to vector<16x32xf32>
    %112 = arith.mulf %110, %111 : vector<16x32xf32>
    %cst_31 = arith.constant 0.000000e+00 : f32
    %113 = vector.broadcast %cst_31 : f32 to vector<4x32xf32>
    %114 = tpu.concatenate %113, %112, %113 in 0 : vector<4x32xf32>, vector<16x32xf32>, vector<4x32xf32> -> vector<24x32xf32>
    %115 = arith.truncf %114 : vector<24x32xf32> to vector<24x32xbf16>
    %116 = vector.extract_strided_slice %115 {offsets = [0, 0], sizes = [16, 32], strides = [1, 1]} : vector<24x32xbf16> to vector<16x32xbf16>
    %c0_32 = arith.constant 0 : index
    %c0_33 = arith.constant 0 : index
    %c0_34 = arith.constant 0 : index
    %c0_35 = arith.constant 0 : index
    %117 = vector.load %arg6[%c0_32, %c0_33, %c0_34, %c0_35] : memref<2x9x32x64xbf16, #tpu.memory_space<vmem>>, vector<1x1x32x64xbf16>
    %118 = vector.shape_cast %117 : vector<1x1x32x64xbf16> to vector<32x64xbf16>
    %cst_36 = arith.constant dense<0.000000e+00> : vector<16x64xf32>
    %119 = tpu.matmul %116, %118, %cst_36 {dimension_numbers = #tpu.dot_dimension_numbers<[1], [0], [0], [1], [0, 0, 1, 1], [], []>} : vector<16x32xbf16>, vector<32x64xbf16>, vector<16x64xf32> -> vector<16x64xf32>
    %120 = vector.extract_strided_slice %115 {offsets = [1, 0], sizes = [16, 32], strides = [1, 1]} : vector<24x32xbf16> to vector<16x32xbf16>
    %c0_37 = arith.constant 0 : index
    %c1 = arith.constant 1 : index
    %c0_38 = arith.constant 0 : index
    %c0_39 = arith.constant 0 : index
    %121 = vector.load %arg6[%c0_37, %c1, %c0_38, %c0_39] : memref<2x9x32x64xbf16, #tpu.memory_space<vmem>>, vector<1x1x32x64xbf16>
    %122 = vector.shape_cast %121 : vector<1x1x32x64xbf16> to vector<32x64xbf16>
    %cst_40 = arith.constant dense<0.000000e+00> : vector<16x64xf32>
    %123 = tpu.matmul %120, %122, %cst_40 {dimension_numbers = #tpu.dot_dimension_numbers<[1], [0], [0], [1], [0, 0, 1, 1], [], []>} : vector<16x32xbf16>, vector<32x64xbf16>, vector<16x64xf32> -> vector<16x64xf32>
    %124 = arith.addf %119, %123 : vector<16x64xf32>
    %125 = vector.extract_strided_slice %115 {offsets = [2, 0], sizes = [16, 32], strides = [1, 1]} : vector<24x32xbf16> to vector<16x32xbf16>
    %c0_41 = arith.constant 0 : index
    %c2 = arith.constant 2 : index
    %c0_42 = arith.constant 0 : index
    %c0_43 = arith.constant 0 : index
    %126 = vector.load %arg6[%c0_41, %c2, %c0_42, %c0_43] : memref<2x9x32x64xbf16, #tpu.memory_space<vmem>>, vector<1x1x32x64xbf16>
    %127 = vector.shape_cast %126 : vector<1x1x32x64xbf16> to vector<32x64xbf16>
    %cst_44 = arith.constant dense<0.000000e+00> : vector<16x64xf32>
    %128 = tpu.matmul %125, %127, %cst_44 {dimension_numbers = #tpu.dot_dimension_numbers<[1], [0], [0], [1], [0, 0, 1, 1], [], []>} : vector<16x32xbf16>, vector<32x64xbf16>, vector<16x64xf32> -> vector<16x64xf32>
    %129 = arith.addf %124, %128 : vector<16x64xf32>
    %130 = vector.extract_strided_slice %115 {offsets = [3, 0], sizes = [16, 32], strides = [1, 1]} : vector<24x32xbf16> to vector<16x32xbf16>
    %c0_45 = arith.constant 0 : index
    %c3 = arith.constant 3 : index
    %c0_46 = arith.constant 0 : index
    %c0_47 = arith.constant 0 : index
    %131 = vector.load %arg6[%c0_45, %c3, %c0_46, %c0_47] : memref<2x9x32x64xbf16, #tpu.memory_space<vmem>>, vector<1x1x32x64xbf16>
    %132 = vector.shape_cast %131 : vector<1x1x32x64xbf16> to vector<32x64xbf16>
    %cst_48 = arith.constant dense<0.000000e+00> : vector<16x64xf32>
    %133 = tpu.matmul %130, %132, %cst_48 {dimension_numbers = #tpu.dot_dimension_numbers<[1], [0], [0], [1], [0, 0, 1, 1], [], []>} : vector<16x32xbf16>, vector<32x64xbf16>, vector<16x64xf32> -> vector<16x64xf32>
    %134 = arith.addf %129, %133 : vector<16x64xf32>
    %135 = vector.extract_strided_slice %115 {offsets = [4, 0], sizes = [16, 32], strides = [1, 1]} : vector<24x32xbf16> to vector<16x32xbf16>
    %c0_49 = arith.constant 0 : index
    %c4 = arith.constant 4 : index
    %c0_50 = arith.constant 0 : index
    %c0_51 = arith.constant 0 : index
    %136 = vector.load %arg6[%c0_49, %c4, %c0_50, %c0_51] : memref<2x9x32x64xbf16, #tpu.memory_space<vmem>>, vector<1x1x32x64xbf16>
    %137 = vector.shape_cast %136 : vector<1x1x32x64xbf16> to vector<32x64xbf16>
    %cst_52 = arith.constant dense<0.000000e+00> : vector<16x64xf32>
    %138 = tpu.matmul %135, %137, %cst_52 {dimension_numbers = #tpu.dot_dimension_numbers<[1], [0], [0], [1], [0, 0, 1, 1], [], []>} : vector<16x32xbf16>, vector<32x64xbf16>, vector<16x64xf32> -> vector<16x64xf32>
    %139 = arith.addf %134, %138 : vector<16x64xf32>
    %140 = vector.extract_strided_slice %115 {offsets = [5, 0], sizes = [16, 32], strides = [1, 1]} : vector<24x32xbf16> to vector<16x32xbf16>
    %c0_53 = arith.constant 0 : index
    %c5 = arith.constant 5 : index
    %c0_54 = arith.constant 0 : index
    %c0_55 = arith.constant 0 : index
    %141 = vector.load %arg6[%c0_53, %c5, %c0_54, %c0_55] : memref<2x9x32x64xbf16, #tpu.memory_space<vmem>>, vector<1x1x32x64xbf16>
    %142 = vector.shape_cast %141 : vector<1x1x32x64xbf16> to vector<32x64xbf16>
    %cst_56 = arith.constant dense<0.000000e+00> : vector<16x64xf32>
    %143 = tpu.matmul %140, %142, %cst_56 {dimension_numbers = #tpu.dot_dimension_numbers<[1], [0], [0], [1], [0, 0, 1, 1], [], []>} : vector<16x32xbf16>, vector<32x64xbf16>, vector<16x64xf32> -> vector<16x64xf32>
    %144 = arith.addf %139, %143 : vector<16x64xf32>
    %145 = vector.extract_strided_slice %115 {offsets = [6, 0], sizes = [16, 32], strides = [1, 1]} : vector<24x32xbf16> to vector<16x32xbf16>
    %c0_57 = arith.constant 0 : index
    %c6 = arith.constant 6 : index
    %c0_58 = arith.constant 0 : index
    %c0_59 = arith.constant 0 : index
    %146 = vector.load %arg6[%c0_57, %c6, %c0_58, %c0_59] : memref<2x9x32x64xbf16, #tpu.memory_space<vmem>>, vector<1x1x32x64xbf16>
    %147 = vector.shape_cast %146 : vector<1x1x32x64xbf16> to vector<32x64xbf16>
    %cst_60 = arith.constant dense<0.000000e+00> : vector<16x64xf32>
    %148 = tpu.matmul %145, %147, %cst_60 {dimension_numbers = #tpu.dot_dimension_numbers<[1], [0], [0], [1], [0, 0, 1, 1], [], []>} : vector<16x32xbf16>, vector<32x64xbf16>, vector<16x64xf32> -> vector<16x64xf32>
    %149 = arith.addf %144, %148 : vector<16x64xf32>
    %150 = vector.extract_strided_slice %115 {offsets = [7, 0], sizes = [16, 32], strides = [1, 1]} : vector<24x32xbf16> to vector<16x32xbf16>
    %c0_61 = arith.constant 0 : index
    %c7 = arith.constant 7 : index
    %c0_62 = arith.constant 0 : index
    %c0_63 = arith.constant 0 : index
    %151 = vector.load %arg6[%c0_61, %c7, %c0_62, %c0_63] : memref<2x9x32x64xbf16, #tpu.memory_space<vmem>>, vector<1x1x32x64xbf16>
    %152 = vector.shape_cast %151 : vector<1x1x32x64xbf16> to vector<32x64xbf16>
    %cst_64 = arith.constant dense<0.000000e+00> : vector<16x64xf32>
    %153 = tpu.matmul %150, %152, %cst_64 {dimension_numbers = #tpu.dot_dimension_numbers<[1], [0], [0], [1], [0, 0, 1, 1], [], []>} : vector<16x32xbf16>, vector<32x64xbf16>, vector<16x64xf32> -> vector<16x64xf32>
    %154 = arith.addf %149, %153 : vector<16x64xf32>
    %155 = vector.extract_strided_slice %115 {offsets = [8, 0], sizes = [16, 32], strides = [1, 1]} : vector<24x32xbf16> to vector<16x32xbf16>
    %c0_65 = arith.constant 0 : index
    %c8 = arith.constant 8 : index
    %c0_66 = arith.constant 0 : index
    %c0_67 = arith.constant 0 : index
    %156 = vector.load %arg6[%c0_65, %c8, %c0_66, %c0_67] : memref<2x9x32x64xbf16, #tpu.memory_space<vmem>>, vector<1x1x32x64xbf16>
    %157 = vector.shape_cast %156 : vector<1x1x32x64xbf16> to vector<32x64xbf16>
    %cst_68 = arith.constant dense<0.000000e+00> : vector<16x64xf32>
    %158 = tpu.matmul %155, %157, %cst_68 {dimension_numbers = #tpu.dot_dimension_numbers<[1], [0], [0], [1], [0, 0, 1, 1], [], []>} : vector<16x32xbf16>, vector<32x64xbf16>, vector<16x64xf32> -> vector<16x64xf32>
    %159 = arith.addf %154, %158 : vector<16x64xf32>
    %160 = vector.broadcast %23 : vector<1x64xf32> to vector<16x64xf32>
    %161 = arith.addf %159, %160 : vector<16x64xf32>
    %cst_69 = arith.constant 0.000000e+00 : f32
    %162 = vector.broadcast %cst_69 : f32 to vector<16x64xf32>
    %163 = arith.maximumf %161, %162 : vector<16x64xf32>
    %164 = arith.truncf %163 : vector<16x64xf32> to vector<16x64xbf16>
    %c0_70 = arith.constant 0 : index
    %c0_71 = arith.constant 0 : index
    %c0_72 = arith.constant 0 : index
    %c0_73 = arith.constant 0 : index
    %165 = vector.load %arg7[%c0_70, %c0_71, %c0_72, %c0_73] : memref<2x1x64x32xbf16, #tpu.memory_space<vmem>>, vector<1x1x64x32xbf16>
    %166 = vector.shape_cast %165 : vector<1x1x64x32xbf16> to vector<64x32xbf16>
    %cst_74 = arith.constant dense<0.000000e+00> : vector<16x32xf32>
    %167 = tpu.matmul %164, %166, %cst_74 {dimension_numbers = #tpu.dot_dimension_numbers<[1], [0], [0], [1], [0, 0, 1, 1], [], []>} : vector<16x64xbf16>, vector<64x32xbf16>, vector<16x32xf32> -> vector<16x32xf32>
    %168 = vector.broadcast %24 : vector<1x32xf32> to vector<16x32xf32>
    %169 = arith.addf %167, %168 : vector<16x32xf32>
    %170 = arith.addf %169, %112 : vector<16x32xf32>
    %cst_75 = arith.constant dense<0.000000e+00> : vector<16xf32>
    %171 = vector.multi_reduction <add>, %170, %cst_75 [1] : vector<16x32xf32> to vector<16xf32>
    %172 = vector.shape_cast %171 : vector<16xf32> to vector<16x1xf32>
    %cst_76 = arith.constant 3.200000e+01 : f32
    %173 = vector.broadcast %cst_76 : f32 to vector<16x1xf32>
    %174 = arith.divf %172, %173 : vector<16x1xf32>
    %175 = vector.broadcast %174 : vector<16x1xf32> to vector<16x32xf32>
    %176 = arith.subf %170, %175 : vector<16x32xf32>
    %177 = arith.mulf %176, %176 : vector<16x32xf32>
    %cst_77 = arith.constant dense<0.000000e+00> : vector<16xf32>
    %178 = vector.multi_reduction <add>, %177, %cst_77 [1] : vector<16x32xf32> to vector<16xf32>
    %179 = vector.shape_cast %178 : vector<16xf32> to vector<16x1xf32>
    %cst_78 = arith.constant 3.200000e+01 : f32
    %180 = vector.broadcast %cst_78 : f32 to vector<16x1xf32>
    %181 = arith.divf %179, %180 : vector<16x1xf32>
    %182 = vector.broadcast %174 : vector<16x1xf32> to vector<16x32xf32>
    %183 = arith.subf %170, %182 : vector<16x32xf32>
    %cst_79 = arith.constant 9.99999974E-6 : f32
    %184 = vector.broadcast %cst_79 : f32 to vector<16x1xf32>
    %185 = arith.addf %181, %184 : vector<16x1xf32>
    %186 = math.rsqrt %185 : vector<16x1xf32>
    %187 = vector.broadcast %186 : vector<16x1xf32> to vector<16x32xf32>
    %188 = arith.mulf %183, %187 : vector<16x32xf32>
    %189 = vector.broadcast %25 : vector<1x32xf32> to vector<16x32xf32>
    %190 = arith.mulf %188, %189 : vector<16x32xf32>
    %191 = vector.broadcast %26 : vector<1x32xf32> to vector<16x32xf32>
    %192 = arith.addf %190, %191 : vector<16x32xf32>
    %193 = vector.broadcast %12 : vector<16x1xf32> to vector<16x32xf32>
    %194 = arith.mulf %192, %193 : vector<16x32xf32>
    %c1_80 = arith.constant 1 : index
    %c0_81 = arith.constant 0 : index
    %c0_82 = arith.constant 0 : index
    %195 = vector.load %arg8[%c1_80, %c0_81, %c0_82] : memref<2x8x96xf32, #tpu.memory_space<vmem>>, vector<1x8x96xf32>
    %196 = vector.shape_cast %195 : vector<1x8x96xf32> to vector<8x96xf32>
    %197 = vector.extract_strided_slice %196 {offsets = [0, 0], sizes = [1, 96], strides = [1, 1]} : vector<8x96xf32> to vector<1x96xf32>
    %198 = vector.extract_strided_slice %196 {offsets = [1, 0], sizes = [1, 32], strides = [1, 1]} : vector<8x96xf32> to vector<1x32xf32>
    %199 = vector.extract_strided_slice %196 {offsets = [2, 0], sizes = [1, 32], strides = [1, 1]} : vector<8x96xf32> to vector<1x32xf32>
    %200 = vector.extract_strided_slice %196 {offsets = [3, 0], sizes = [1, 32], strides = [1, 1]} : vector<8x96xf32> to vector<1x32xf32>
    %201 = vector.extract_strided_slice %196 {offsets = [4, 0], sizes = [1, 64], strides = [1, 1]} : vector<8x96xf32> to vector<1x64xf32>
    %202 = vector.extract_strided_slice %196 {offsets = [5, 0], sizes = [1, 32], strides = [1, 1]} : vector<8x96xf32> to vector<1x32xf32>
    %203 = vector.extract_strided_slice %196 {offsets = [6, 0], sizes = [1, 32], strides = [1, 1]} : vector<8x96xf32> to vector<1x32xf32>
    %204 = vector.extract_strided_slice %196 {offsets = [7, 0], sizes = [1, 32], strides = [1, 1]} : vector<8x96xf32> to vector<1x32xf32>
    %205 = arith.truncf %194 : vector<16x32xf32> to vector<16x32xbf16>
    %c1_83 = arith.constant 1 : index
    %c0_84 = arith.constant 0 : index
    %c0_85 = arith.constant 0 : index
    %206 = vector.load %arg4[%c1_83, %c0_84, %c0_85] : memref<2x32x96xbf16, #tpu.memory_space<vmem>>, vector<1x32x96xbf16>
    %207 = vector.shape_cast %206 : vector<1x32x96xbf16> to vector<32x96xbf16>
    %cst_86 = arith.constant dense<0.000000e+00> : vector<16x96xf32>
    %208 = tpu.matmul %205, %207, %cst_86 {dimension_numbers = #tpu.dot_dimension_numbers<[1], [0], [0], [1], [0, 0, 1, 1], [], []>} : vector<16x32xbf16>, vector<32x96xbf16>, vector<16x96xf32> -> vector<16x96xf32>
    %209 = vector.broadcast %197 : vector<1x96xf32> to vector<16x96xf32>
    %210 = arith.addf %208, %209 : vector<16x96xf32>
    %211 = vector.extract_strided_slice %210 {offsets = [0, 0], sizes = [16, 16], strides = [1, 1]} : vector<16x96xf32> to vector<16x16xf32>
    %212 = vector.extract_strided_slice %210 {offsets = [0, 32], sizes = [16, 16], strides = [1, 1]} : vector<16x96xf32> to vector<16x16xf32>
    %213 = vector.extract_strided_slice %210 {offsets = [0, 64], sizes = [16, 16], strides = [1, 1]} : vector<16x96xf32> to vector<16x16xf32>
    %214 = arith.truncf %211 : vector<16x16xf32> to vector<16x16xbf16>
    %215 = tpu.transpose %212, [1, 0] : vector<16x16xf32> -> vector<16x16xf32>
    %216 = arith.truncf %215 : vector<16x16xf32> to vector<16x16xbf16>
    %cst_87 = arith.constant dense<0.000000e+00> : vector<16x16xf32>
    %217 = tpu.matmul %214, %216, %cst_87 {dimension_numbers = #tpu.dot_dimension_numbers<[1], [0], [0], [1], [0, 0, 1, 1], [], []>} : vector<16x16xbf16>, vector<16x16xbf16>, vector<16x16xf32> -> vector<16x16xf32>
    %cst_88 = arith.constant 2.500000e-01 : f32
    %218 = vector.broadcast %cst_88 : f32 to vector<16x16xf32>
    %219 = arith.mulf %217, %218 : vector<16x16xf32>
    %220 = vector.broadcast %7 : vector<1x16xf32> to vector<16x16xf32>
    %221 = arith.addf %219, %220 : vector<16x16xf32>
    %cst_89 = arith.constant dense<0xFF800000> : vector<16xf32>
    %222 = vector.multi_reduction <maximumf>, %221, %cst_89 [1] : vector<16x16xf32> to vector<16xf32>
    %223 = vector.shape_cast %222 : vector<16xf32> to vector<16x1xf32>
    %224 = vector.broadcast %223 : vector<16x1xf32> to vector<16x16xf32>
    %225 = arith.subf %221, %224 : vector<16x16xf32>
    %226 = math.exp %225 : vector<16x16xf32>
    %cst_90 = arith.constant dense<0.000000e+00> : vector<16xf32>
    %227 = vector.multi_reduction <add>, %226, %cst_90 [1] : vector<16x16xf32> to vector<16xf32>
    %228 = vector.shape_cast %227 : vector<16xf32> to vector<16x1xf32>
    %229 = tpu.reciprocal %228 {approx = true} : vector<16x1xf32> -> vector<16x1xf32>
    %230 = vector.broadcast %229 : vector<16x1xf32> to vector<16x16xf32>
    %231 = arith.mulf %226, %230 : vector<16x16xf32>
    %232 = arith.truncf %231 : vector<16x16xf32> to vector<16x16xbf16>
    %233 = arith.truncf %213 : vector<16x16xf32> to vector<16x16xbf16>
    %cst_91 = arith.constant dense<0.000000e+00> : vector<16x16xf32>
    %234 = tpu.matmul %232, %233, %cst_91 {dimension_numbers = #tpu.dot_dimension_numbers<[1], [0], [0], [1], [0, 0, 1, 1], [], []>} : vector<16x16xbf16>, vector<16x16xbf16>, vector<16x16xf32> -> vector<16x16xf32>
    %235 = vector.extract_strided_slice %210 {offsets = [0, 16], sizes = [16, 16], strides = [1, 1]} : vector<16x96xf32> to vector<16x16xf32>
    %236 = vector.extract_strided_slice %210 {offsets = [0, 48], sizes = [16, 16], strides = [1, 1]} : vector<16x96xf32> to vector<16x16xf32>
    %237 = vector.extract_strided_slice %210 {offsets = [0, 80], sizes = [16, 16], strides = [1, 1]} : vector<16x96xf32> to vector<16x16xf32>
    %238 = arith.truncf %235 : vector<16x16xf32> to vector<16x16xbf16>
    %239 = tpu.transpose %236, [1, 0] : vector<16x16xf32> -> vector<16x16xf32>
    %240 = arith.truncf %239 : vector<16x16xf32> to vector<16x16xbf16>
    %cst_92 = arith.constant dense<0.000000e+00> : vector<16x16xf32>
    %241 = tpu.matmul %238, %240, %cst_92 {dimension_numbers = #tpu.dot_dimension_numbers<[1], [0], [0], [1], [0, 0, 1, 1], [], []>} : vector<16x16xbf16>, vector<16x16xbf16>, vector<16x16xf32> -> vector<16x16xf32>
    %cst_93 = arith.constant 2.500000e-01 : f32
    %242 = vector.broadcast %cst_93 : f32 to vector<16x16xf32>
    %243 = arith.mulf %241, %242 : vector<16x16xf32>
    %244 = vector.broadcast %7 : vector<1x16xf32> to vector<16x16xf32>
    %245 = arith.addf %243, %244 : vector<16x16xf32>
    %cst_94 = arith.constant dense<0xFF800000> : vector<16xf32>
    %246 = vector.multi_reduction <maximumf>, %245, %cst_94 [1] : vector<16x16xf32> to vector<16xf32>
    %247 = vector.shape_cast %246 : vector<16xf32> to vector<16x1xf32>
    %248 = vector.broadcast %247 : vector<16x1xf32> to vector<16x16xf32>
    %249 = arith.subf %245, %248 : vector<16x16xf32>
    %250 = math.exp %249 : vector<16x16xf32>
    %cst_95 = arith.constant dense<0.000000e+00> : vector<16xf32>
    %251 = vector.multi_reduction <add>, %250, %cst_95 [1] : vector<16x16xf32> to vector<16xf32>
    %252 = vector.shape_cast %251 : vector<16xf32> to vector<16x1xf32>
    %253 = tpu.reciprocal %252 {approx = true} : vector<16x1xf32> -> vector<16x1xf32>
    %254 = vector.broadcast %253 : vector<16x1xf32> to vector<16x16xf32>
    %255 = arith.mulf %250, %254 : vector<16x16xf32>
    %256 = arith.truncf %255 : vector<16x16xf32> to vector<16x16xbf16>
    %257 = arith.truncf %237 : vector<16x16xf32> to vector<16x16xbf16>
    %cst_96 = arith.constant dense<0.000000e+00> : vector<16x16xf32>
    %258 = tpu.matmul %256, %257, %cst_96 {dimension_numbers = #tpu.dot_dimension_numbers<[1], [0], [0], [1], [0, 0, 1, 1], [], []>} : vector<16x16xbf16>, vector<16x16xbf16>, vector<16x16xf32> -> vector<16x16xf32>
    %259 = tpu.concatenate %234, %258 in 1 : vector<16x16xf32>, vector<16x16xf32> -> vector<16x32xf32>
    %260 = arith.truncf %259 : vector<16x32xf32> to vector<16x32xbf16>
    %c1_97 = arith.constant 1 : index
    %c0_98 = arith.constant 0 : index
    %c0_99 = arith.constant 0 : index
    %261 = vector.load %arg5[%c1_97, %c0_98, %c0_99] : memref<2x32x32xbf16, #tpu.memory_space<vmem>>, vector<1x32x32xbf16>
    %262 = vector.shape_cast %261 : vector<1x32x32xbf16> to vector<32x32xbf16>
    %cst_100 = arith.constant dense<0.000000e+00> : vector<16x32xf32>
    %263 = tpu.matmul %260, %262, %cst_100 {dimension_numbers = #tpu.dot_dimension_numbers<[1], [0], [0], [1], [0, 0, 1, 1], [], []>} : vector<16x32xbf16>, vector<32x32xbf16>, vector<16x32xf32> -> vector<16x32xf32>
    %264 = vector.broadcast %198 : vector<1x32xf32> to vector<16x32xf32>
    %265 = arith.addf %263, %264 : vector<16x32xf32>
    %266 = arith.addf %265, %194 : vector<16x32xf32>
    %cst_101 = arith.constant dense<0.000000e+00> : vector<16xf32>
    %267 = vector.multi_reduction <add>, %266, %cst_101 [1] : vector<16x32xf32> to vector<16xf32>
    %268 = vector.shape_cast %267 : vector<16xf32> to vector<16x1xf32>
    %cst_102 = arith.constant 3.200000e+01 : f32
    %269 = vector.broadcast %cst_102 : f32 to vector<16x1xf32>
    %270 = arith.divf %268, %269 : vector<16x1xf32>
    %271 = vector.broadcast %270 : vector<16x1xf32> to vector<16x32xf32>
    %272 = arith.subf %266, %271 : vector<16x32xf32>
    %273 = arith.mulf %272, %272 : vector<16x32xf32>
    %cst_103 = arith.constant dense<0.000000e+00> : vector<16xf32>
    %274 = vector.multi_reduction <add>, %273, %cst_103 [1] : vector<16x32xf32> to vector<16xf32>
    %275 = vector.shape_cast %274 : vector<16xf32> to vector<16x1xf32>
    %cst_104 = arith.constant 3.200000e+01 : f32
    %276 = vector.broadcast %cst_104 : f32 to vector<16x1xf32>
    %277 = arith.divf %275, %276 : vector<16x1xf32>
    %278 = vector.broadcast %270 : vector<16x1xf32> to vector<16x32xf32>
    %279 = arith.subf %266, %278 : vector<16x32xf32>
    %cst_105 = arith.constant 9.99999974E-6 : f32
    %280 = vector.broadcast %cst_105 : f32 to vector<16x1xf32>
    %281 = arith.addf %277, %280 : vector<16x1xf32>
    %282 = math.rsqrt %281 : vector<16x1xf32>
    %283 = vector.broadcast %282 : vector<16x1xf32> to vector<16x32xf32>
    %284 = arith.mulf %279, %283 : vector<16x32xf32>
    %285 = vector.broadcast %199 : vector<1x32xf32> to vector<16x32xf32>
    %286 = arith.mulf %284, %285 : vector<16x32xf32>
    %287 = vector.broadcast %200 : vector<1x32xf32> to vector<16x32xf32>
    %288 = arith.addf %286, %287 : vector<16x32xf32>
    %289 = vector.broadcast %12 : vector<16x1xf32> to vector<16x32xf32>
    %290 = arith.mulf %288, %289 : vector<16x32xf32>
    %cst_106 = arith.constant 0.000000e+00 : f32
    %291 = vector.broadcast %cst_106 : f32 to vector<4x32xf32>
    %292 = tpu.concatenate %291, %290, %291 in 0 : vector<4x32xf32>, vector<16x32xf32>, vector<4x32xf32> -> vector<24x32xf32>
    %293 = arith.truncf %292 : vector<24x32xf32> to vector<24x32xbf16>
    %294 = vector.extract_strided_slice %293 {offsets = [0, 0], sizes = [16, 32], strides = [1, 1]} : vector<24x32xbf16> to vector<16x32xbf16>
    %c1_107 = arith.constant 1 : index
    %c0_108 = arith.constant 0 : index
    %c0_109 = arith.constant 0 : index
    %c0_110 = arith.constant 0 : index
    %295 = vector.load %arg6[%c1_107, %c0_108, %c0_109, %c0_110] : memref<2x9x32x64xbf16, #tpu.memory_space<vmem>>, vector<1x1x32x64xbf16>
    %296 = vector.shape_cast %295 : vector<1x1x32x64xbf16> to vector<32x64xbf16>
    %cst_111 = arith.constant dense<0.000000e+00> : vector<16x64xf32>
    %297 = tpu.matmul %294, %296, %cst_111 {dimension_numbers = #tpu.dot_dimension_numbers<[1], [0], [0], [1], [0, 0, 1, 1], [], []>} : vector<16x32xbf16>, vector<32x64xbf16>, vector<16x64xf32> -> vector<16x64xf32>
    %298 = vector.extract_strided_slice %293 {offsets = [1, 0], sizes = [16, 32], strides = [1, 1]} : vector<24x32xbf16> to vector<16x32xbf16>
    %c1_112 = arith.constant 1 : index
    %c1_113 = arith.constant 1 : index
    %c0_114 = arith.constant 0 : index
    %c0_115 = arith.constant 0 : index
    %299 = vector.load %arg6[%c1_112, %c1_113, %c0_114, %c0_115] : memref<2x9x32x64xbf16, #tpu.memory_space<vmem>>, vector<1x1x32x64xbf16>
    %300 = vector.shape_cast %299 : vector<1x1x32x64xbf16> to vector<32x64xbf16>
    %cst_116 = arith.constant dense<0.000000e+00> : vector<16x64xf32>
    %301 = tpu.matmul %298, %300, %cst_116 {dimension_numbers = #tpu.dot_dimension_numbers<[1], [0], [0], [1], [0, 0, 1, 1], [], []>} : vector<16x32xbf16>, vector<32x64xbf16>, vector<16x64xf32> -> vector<16x64xf32>
    %302 = arith.addf %297, %301 : vector<16x64xf32>
    %303 = vector.extract_strided_slice %293 {offsets = [2, 0], sizes = [16, 32], strides = [1, 1]} : vector<24x32xbf16> to vector<16x32xbf16>
    %c1_117 = arith.constant 1 : index
    %c2_118 = arith.constant 2 : index
    %c0_119 = arith.constant 0 : index
    %c0_120 = arith.constant 0 : index
    %304 = vector.load %arg6[%c1_117, %c2_118, %c0_119, %c0_120] : memref<2x9x32x64xbf16, #tpu.memory_space<vmem>>, vector<1x1x32x64xbf16>
    %305 = vector.shape_cast %304 : vector<1x1x32x64xbf16> to vector<32x64xbf16>
    %cst_121 = arith.constant dense<0.000000e+00> : vector<16x64xf32>
    %306 = tpu.matmul %303, %305, %cst_121 {dimension_numbers = #tpu.dot_dimension_numbers<[1], [0], [0], [1], [0, 0, 1, 1], [], []>} : vector<16x32xbf16>, vector<32x64xbf16>, vector<16x64xf32> -> vector<16x64xf32>
    %307 = arith.addf %302, %306 : vector<16x64xf32>
    %308 = vector.extract_strided_slice %293 {offsets = [3, 0], sizes = [16, 32], strides = [1, 1]} : vector<24x32xbf16> to vector<16x32xbf16>
    %c1_122 = arith.constant 1 : index
    %c3_123 = arith.constant 3 : index
    %c0_124 = arith.constant 0 : index
    %c0_125 = arith.constant 0 : index
    %309 = vector.load %arg6[%c1_122, %c3_123, %c0_124, %c0_125] : memref<2x9x32x64xbf16, #tpu.memory_space<vmem>>, vector<1x1x32x64xbf16>
    %310 = vector.shape_cast %309 : vector<1x1x32x64xbf16> to vector<32x64xbf16>
    %cst_126 = arith.constant dense<0.000000e+00> : vector<16x64xf32>
    %311 = tpu.matmul %308, %310, %cst_126 {dimension_numbers = #tpu.dot_dimension_numbers<[1], [0], [0], [1], [0, 0, 1, 1], [], []>} : vector<16x32xbf16>, vector<32x64xbf16>, vector<16x64xf32> -> vector<16x64xf32>
    %312 = arith.addf %307, %311 : vector<16x64xf32>
    %313 = vector.extract_strided_slice %293 {offsets = [4, 0], sizes = [16, 32], strides = [1, 1]} : vector<24x32xbf16> to vector<16x32xbf16>
    %c1_127 = arith.constant 1 : index
    %c4_128 = arith.constant 4 : index
    %c0_129 = arith.constant 0 : index
    %c0_130 = arith.constant 0 : index
    %314 = vector.load %arg6[%c1_127, %c4_128, %c0_129, %c0_130] : memref<2x9x32x64xbf16, #tpu.memory_space<vmem>>, vector<1x1x32x64xbf16>
    %315 = vector.shape_cast %314 : vector<1x1x32x64xbf16> to vector<32x64xbf16>
    %cst_131 = arith.constant dense<0.000000e+00> : vector<16x64xf32>
    %316 = tpu.matmul %313, %315, %cst_131 {dimension_numbers = #tpu.dot_dimension_numbers<[1], [0], [0], [1], [0, 0, 1, 1], [], []>} : vector<16x32xbf16>, vector<32x64xbf16>, vector<16x64xf32> -> vector<16x64xf32>
    %317 = arith.addf %312, %316 : vector<16x64xf32>
    %318 = vector.extract_strided_slice %293 {offsets = [5, 0], sizes = [16, 32], strides = [1, 1]} : vector<24x32xbf16> to vector<16x32xbf16>
    %c1_132 = arith.constant 1 : index
    %c5_133 = arith.constant 5 : index
    %c0_134 = arith.constant 0 : index
    %c0_135 = arith.constant 0 : index
    %319 = vector.load %arg6[%c1_132, %c5_133, %c0_134, %c0_135] : memref<2x9x32x64xbf16, #tpu.memory_space<vmem>>, vector<1x1x32x64xbf16>
    %320 = vector.shape_cast %319 : vector<1x1x32x64xbf16> to vector<32x64xbf16>
    %cst_136 = arith.constant dense<0.000000e+00> : vector<16x64xf32>
    %321 = tpu.matmul %318, %320, %cst_136 {dimension_numbers = #tpu.dot_dimension_numbers<[1], [0], [0], [1], [0, 0, 1, 1], [], []>} : vector<16x32xbf16>, vector<32x64xbf16>, vector<16x64xf32> -> vector<16x64xf32>
    %322 = arith.addf %317, %321 : vector<16x64xf32>
    %323 = vector.extract_strided_slice %293 {offsets = [6, 0], sizes = [16, 32], strides = [1, 1]} : vector<24x32xbf16> to vector<16x32xbf16>
    %c1_137 = arith.constant 1 : index
    %c6_138 = arith.constant 6 : index
    %c0_139 = arith.constant 0 : index
    %c0_140 = arith.constant 0 : index
    %324 = vector.load %arg6[%c1_137, %c6_138, %c0_139, %c0_140] : memref<2x9x32x64xbf16, #tpu.memory_space<vmem>>, vector<1x1x32x64xbf16>
    %325 = vector.shape_cast %324 : vector<1x1x32x64xbf16> to vector<32x64xbf16>
    %cst_141 = arith.constant dense<0.000000e+00> : vector<16x64xf32>
    %326 = tpu.matmul %323, %325, %cst_141 {dimension_numbers = #tpu.dot_dimension_numbers<[1], [0], [0], [1], [0, 0, 1, 1], [], []>} : vector<16x32xbf16>, vector<32x64xbf16>, vector<16x64xf32> -> vector<16x64xf32>
    %327 = arith.addf %322, %326 : vector<16x64xf32>
    %328 = vector.extract_strided_slice %293 {offsets = [7, 0], sizes = [16, 32], strides = [1, 1]} : vector<24x32xbf16> to vector<16x32xbf16>
    %c1_142 = arith.constant 1 : index
    %c7_143 = arith.constant 7 : index
    %c0_144 = arith.constant 0 : index
    %c0_145 = arith.constant 0 : index
    %329 = vector.load %arg6[%c1_142, %c7_143, %c0_144, %c0_145] : memref<2x9x32x64xbf16, #tpu.memory_space<vmem>>, vector<1x1x32x64xbf16>
    %330 = vector.shape_cast %329 : vector<1x1x32x64xbf16> to vector<32x64xbf16>
    %cst_146 = arith.constant dense<0.000000e+00> : vector<16x64xf32>
    %331 = tpu.matmul %328, %330, %cst_146 {dimension_numbers = #tpu.dot_dimension_numbers<[1], [0], [0], [1], [0, 0, 1, 1], [], []>} : vector<16x32xbf16>, vector<32x64xbf16>, vector<16x64xf32> -> vector<16x64xf32>
    %332 = arith.addf %327, %331 : vector<16x64xf32>
    %333 = vector.extract_strided_slice %293 {offsets = [8, 0], sizes = [16, 32], strides = [1, 1]} : vector<24x32xbf16> to vector<16x32xbf16>
    %c1_147 = arith.constant 1 : index
    %c8_148 = arith.constant 8 : index
    %c0_149 = arith.constant 0 : index
    %c0_150 = arith.constant 0 : index
    %334 = vector.load %arg6[%c1_147, %c8_148, %c0_149, %c0_150] : memref<2x9x32x64xbf16, #tpu.memory_space<vmem>>, vector<1x1x32x64xbf16>
    %335 = vector.shape_cast %334 : vector<1x1x32x64xbf16> to vector<32x64xbf16>
    %cst_151 = arith.constant dense<0.000000e+00> : vector<16x64xf32>
    %336 = tpu.matmul %333, %335, %cst_151 {dimension_numbers = #tpu.dot_dimension_numbers<[1], [0], [0], [1], [0, 0, 1, 1], [], []>} : vector<16x32xbf16>, vector<32x64xbf16>, vector<16x64xf32> -> vector<16x64xf32>
    %337 = arith.addf %332, %336 : vector<16x64xf32>
    %338 = vector.broadcast %201 : vector<1x64xf32> to vector<16x64xf32>
    %339 = arith.addf %337, %338 : vector<16x64xf32>
    %cst_152 = arith.constant 0.000000e+00 : f32
    %340 = vector.broadcast %cst_152 : f32 to vector<16x64xf32>
    %341 = arith.maximumf %339, %340 : vector<16x64xf32>
    %342 = arith.truncf %341 : vector<16x64xf32> to vector<16x64xbf16>
    %c1_153 = arith.constant 1 : index
    %c0_154 = arith.constant 0 : index
    %c0_155 = arith.constant 0 : index
    %c0_156 = arith.constant 0 : index
    %343 = vector.load %arg7[%c1_153, %c0_154, %c0_155, %c0_156] : memref<2x1x64x32xbf16, #tpu.memory_space<vmem>>, vector<1x1x64x32xbf16>
    %344 = vector.shape_cast %343 : vector<1x1x64x32xbf16> to vector<64x32xbf16>
    %cst_157 = arith.constant dense<0.000000e+00> : vector<16x32xf32>
    %345 = tpu.matmul %342, %344, %cst_157 {dimension_numbers = #tpu.dot_dimension_numbers<[1], [0], [0], [1], [0, 0, 1, 1], [], []>} : vector<16x64xbf16>, vector<64x32xbf16>, vector<16x32xf32> -> vector<16x32xf32>
    %346 = vector.broadcast %202 : vector<1x32xf32> to vector<16x32xf32>
    %347 = arith.addf %345, %346 : vector<16x32xf32>
    %348 = arith.addf %347, %290 : vector<16x32xf32>
    %cst_158 = arith.constant dense<0.000000e+00> : vector<16xf32>
    %349 = vector.multi_reduction <add>, %348, %cst_158 [1] : vector<16x32xf32> to vector<16xf32>
    %350 = vector.shape_cast %349 : vector<16xf32> to vector<16x1xf32>
    %cst_159 = arith.constant 3.200000e+01 : f32
    %351 = vector.broadcast %cst_159 : f32 to vector<16x1xf32>
    %352 = arith.divf %350, %351 : vector<16x1xf32>
    %353 = vector.broadcast %352 : vector<16x1xf32> to vector<16x32xf32>
    %354 = arith.subf %348, %353 : vector<16x32xf32>
    %355 = arith.mulf %354, %354 : vector<16x32xf32>
    %cst_160 = arith.constant dense<0.000000e+00> : vector<16xf32>
    %356 = vector.multi_reduction <add>, %355, %cst_160 [1] : vector<16x32xf32> to vector<16xf32>
    %357 = vector.shape_cast %356 : vector<16xf32> to vector<16x1xf32>
    %cst_161 = arith.constant 3.200000e+01 : f32
    %358 = vector.broadcast %cst_161 : f32 to vector<16x1xf32>
    %359 = arith.divf %357, %358 : vector<16x1xf32>
    %360 = vector.broadcast %352 : vector<16x1xf32> to vector<16x32xf32>
    %361 = arith.subf %348, %360 : vector<16x32xf32>
    %cst_162 = arith.constant 9.99999974E-6 : f32
    %362 = vector.broadcast %cst_162 : f32 to vector<16x1xf32>
    %363 = arith.addf %359, %362 : vector<16x1xf32>
    %364 = math.rsqrt %363 : vector<16x1xf32>
    %365 = vector.broadcast %364 : vector<16x1xf32> to vector<16x32xf32>
    %366 = arith.mulf %361, %365 : vector<16x32xf32>
    %367 = vector.broadcast %203 : vector<1x32xf32> to vector<16x32xf32>
    %368 = arith.mulf %366, %367 : vector<16x32xf32>
    %369 = vector.broadcast %204 : vector<1x32xf32> to vector<16x32xf32>
    %370 = arith.addf %368, %369 : vector<16x32xf32>
    %371 = vector.broadcast %12 : vector<16x1xf32> to vector<16x32xf32>
    %372 = arith.mulf %370, %371 : vector<16x32xf32>
    %c0_163 = arith.constant 0 : index
    %c0_164 = arith.constant 0 : index
    %c0_165 = arith.constant 0 : index
    %373 = vector.load %arg9[%c0_163, %c0_164, %c0_165] : memref<1x16x32xf32, #tpu.memory_space<vmem>>, vector<1x16x32xf32>
    %374 = vector.shape_cast %373 : vector<1x16x32xf32> to vector<16x32xf32>
    %375 = vector.shape_cast %372 : vector<16x32xf32> to vector<1x16x32xf32>
    tpu.vector_store %arg9[%c0_163, %c0_164, %c0_165], %375 {strides = array<i32>} : memref<1x16x32xf32, #tpu.memory_space<vmem>>, vector<1x16x32xf32>,
    return
  }
  func.func @transform_0(%arg0: i32, %arg1: memref<2xi32, #tpu.memory_space<smem>>) -> (i32, i32, i32) {
    %c0_i32 = arith.constant 0 : i32
    %c0_i32_0 = arith.constant 0 : i32
    %c0_i32_1 = arith.constant 0 : i32
    return %arg0, %c0_i32, %c0_i32_0 : i32, i32, i32
  }
  func.func @transform_1(%arg0: i32, %arg1: memref<2xi32, #tpu.memory_space<smem>>) -> (i32, i32) {
    %c0_i32 = arith.constant 0 : i32
    %c0_i32_0 = arith.constant 0 : i32
    %c0_i32_1 = arith.constant 0 : i32
    return %c0_i32, %c0_i32_0 : i32, i32
  }
  func.func @transform_2(%arg0: i32, %arg1: memref<2xi32, #tpu.memory_space<smem>>) -> (i32, i32, i32) {
    %c0_i32 = arith.constant 0 : i32
    %c0_i32_0 = arith.constant 0 : i32
    %c0_i32_1 = arith.constant 0 : i32
    %c0_i32_2 = arith.constant 0 : i32
    return %c0_i32, %c0_i32_0, %c0_i32_1 : i32, i32, i32
  }
  func.func @transform_3(%arg0: i32, %arg1: memref<2xi32, #tpu.memory_space<smem>>) -> (i32, i32, i32) {
    %c0_i32 = arith.constant 0 : i32
    %c0_i32_0 = arith.constant 0 : i32
    %c0_i32_1 = arith.constant 0 : i32
    %c0_i32_2 = arith.constant 0 : i32
    return %c0_i32, %c0_i32_0, %c0_i32_1 : i32, i32, i32
  }
  func.func @transform_4(%arg0: i32, %arg1: memref<2xi32, #tpu.memory_space<smem>>) -> (i32, i32, i32, i32) {
    %c0_i32 = arith.constant 0 : i32
    %c0_i32_0 = arith.constant 0 : i32
    %c0_i32_1 = arith.constant 0 : i32
    %c0_i32_2 = arith.constant 0 : i32
    %c0_i32_3 = arith.constant 0 : i32
    return %c0_i32, %c0_i32_0, %c0_i32_1, %c0_i32_2 : i32, i32, i32, i32
  }
  func.func @transform_5(%arg0: i32, %arg1: memref<2xi32, #tpu.memory_space<smem>>) -> (i32, i32, i32, i32) {
    %c0_i32 = arith.constant 0 : i32
    %c0_i32_0 = arith.constant 0 : i32
    %c0_i32_1 = arith.constant 0 : i32
    %c0_i32_2 = arith.constant 0 : i32
    %c0_i32_3 = arith.constant 0 : i32
    return %c0_i32, %c0_i32_0, %c0_i32_1, %c0_i32_2 : i32, i32, i32, i32
  }
  func.func @transform_6(%arg0: i32, %arg1: memref<2xi32, #tpu.memory_space<smem>>) -> (i32, i32, i32) {
    %c0_i32 = arith.constant 0 : i32
    %c0_i32_0 = arith.constant 0 : i32
    %c0_i32_1 = arith.constant 0 : i32
    %c0_i32_2 = arith.constant 0 : i32
    return %c0_i32, %c0_i32_0, %c0_i32_1 : i32, i32, i32
  }
  func.func @transform_7(%arg0: i32, %arg1: memref<2xi32, #tpu.memory_space<smem>>) -> (i32, i32, i32) {
    %c0_i32 = arith.constant 0 : i32
    %c0_i32_0 = arith.constant 0 : i32
    %c0_i32_1 = arith.constant 0 : i32
    return %arg0, %c0_i32, %c0_i32_0 : i32, i32, i32
  }
}

</mosaic_0001>

<llo_original>
// kernel: tpu_custom_call.1
$region0: #{tpu_custom_call.1}
  #allocation0 [shape = 'u32[]', space=smem, size = 0x4, offset = 0x4, fixed_abs, tag = 'smem constant byte address 0x4 - core index']
  #allocation1 [shape = 'u32[72,128]{1,0:T(1,128)}', space=vmem, size = 0x9000, scoped, tag = 'internal scratch']
  #allocation2 [shape = 's32[1]{0}', space=sflag, size = 0x4, scoped, tag = 'scoped memory for tpu_custom_call.1']
  #allocation3 [shape = 'u8[512]{0}', space=smem, size = 0x200, scoped, tag = 'prefetched SMEM operand 0']
  %s0 = inlined_call_operand.hbm [shape: s32[2], index: 0, kind: input, shape index: {}]
  %s1 = inlined_call_operand.vmem [shape: f32[2,16,32], index: 1, kind: input, shape index: {}]
  %s2 = inlined_call_operand.hbm [shape: f32[16,32], index: 2, kind: input, shape index: {}]
  %s3 = inlined_call_operand.vmem [shape: bf16[2,32,96], index: 3, kind: input, shape index: {}]
  %s4 = inlined_call_operand.vmem [shape: bf16[2,32,32], index: 4, kind: input, shape index: {}]
  %s5 = inlined_call_operand.hbm [shape: bf16[2,9,32,64], index: 5, kind: input, shape index: {}]
  %s6 = inlined_call_operand.vmem [shape: bf16[2,1,64,32], index: 6, kind: input, shape index: {}]
  %s7 = inlined_call_operand.hbm [shape: f32[2,8,96], index: 7, kind: input, shape index: {}]
  %s8 = inlined_call_operand.hbm [shape: f32[2,16,32], index: 8, kind: output, shape index: {}]
  %s9 = sld [smem:[#allocation0]]
  $region73: #{tpu_custom_call.1} parent=0
    _
  %s11 = ssub.s32 1, %s9
  %s12 = scalar_select 0, %s11, %s9
  %s14 = sshll.u32 %s0, 4
  %s15 = int_to_ptr.hbm [resolvable:$true] %s14
  %17 = dma.hbm_to_smem %s15, 16, [#allocation3], [#allocation2]
  %19 = dma.done [#allocation2], 16
  %20 = sfence
  $region1: #{tpu_custom_call.1} parent=0
    #allocation4 [shape = 'u8[8192]{0}', space=vmem, size = 0x2000, scoped, tag = 'input window, operand 2, single buffered']
    #allocation5 [shape = 's32[2]{0}', space=sflag, size = 0x8, scoped, tag = 'scoped memory for tpu_custom_call.1']
    #allocation6 [shape = 's32[2]{0}', space=sflag, size = 0x8, scoped, tag = 'scoped memory for tpu_custom_call.1']
    #allocation7 [shape = 'u8[147456]{0}', space=vmem, size = 0x24000, scoped, tag = 'input window, operand 5, single buffered']
    #allocation8 [shape = 's32[1]{0}', space=sflag, size = 0x4, scoped, tag = 'scoped memory for tpu_custom_call.1']
    #allocation9 [shape = 'u8[8192]{0}', space=vmem, size = 0x2000, scoped, tag = 'input window, operand 7, single buffered']
    #allocation10 [shape = 'u8[16384]{0}', space=vmem, size = 0x4000, scoped, tag = 'output window, operand 0']
    %21 = vsyncpa [#allocation5], 0
    %22 = vsyncpa [#allocation8], 0
    %23 = vsyncpa [#allocation6], 0
    %s24 = scalar_lea.sflag [#allocation6], 1
    %25 = vsyncpa %s24, 0
    loop: start=0, step=1, limit=4
    $region2: #{tpu_custom_call.1} parent=1 // loop_pre_header
      _
    $region3: #{tpu_custom_call.1} parent=1 // loop_header
      %s27 = sphi 0, %s31
      %p28 = scmp.ge.s32.totalorder %s27, 4
      %s37 = sphi 0, %s39
      %s40 = sphi 0, %s37
      %s41 = sphi 0, %s40
      %s57 = sphi 0, %s41
      %s61 = sphi 0, %s61
      %s63 = sphi 0, %s61
      %s64 = sphi 0, %s63
      %s78 = sphi 0, %s64
      %s82 = sphi 0, %s82
      %s84 = sphi 0, %s82
      %s85 = sphi 0, %s84
      %s99 = sphi 0, %s85
      %s103 = sphi 0, %s103
      %s105 = sphi 0, %s103
      %s106 = sphi 0, %s105
      %s120 = sphi 0, %s106
      %s124 = sphi 0, %s124
      %s126 = sphi 0, %s124
      %s127 = sphi 0, %s126
      %s141 = sphi 0, %s127
      %s145 = sphi 0, %s145
      %s147 = sphi 0, %s145
      %s148 = sphi 0, %s147
      %s162 = sphi 0, %s148
      %s166 = sphi 0, %s166
      %s168 = sphi 0, %s166
      %s169 = sphi 0, %s168
      %s183 = sphi 0, %s169
      %s189 = sphi 0, %s191
      %s192 = sphi 0, %s189
      %s193 = sphi 0, %s192
      %s209 = sphi 0, %s193
    $region4: #{tpu_custom_call.1} parent=1 // loop_header_branch
      %30 = sbr.rel (%p28) target = $region8
    $region5: #{tpu_custom_call.1} parent=1 // loop_body
      %s32 = ssub.s32 %s27, 1
      %s33 = ssub.s32 %s27, 2
      %s34 = sadd.s32 %s27, 1
      %s35 = ssub.s32 %s27, %s34
      %p36 = scmp.eq.s32.totalorder %s35, 0
      %s38 = sadd.s32 %s37, 1
      %s39 = scalar_select %p36, %s37, %s38
      %p42 = pneg %p36
      %p43 = scmp.eq.s32.totalorder %s27, 1
      %p44 = por %p42, %p43
      %p45 = scmp.ne.s32.totalorder %s37, %s40
      %p46 = scmp.eq.s32.totalorder %s27, 0
      %p47 = por %p45, %p46
      %p48 = scmp.ne.s32.totalorder %s37, %s40
      %p49 = scmp.eq.s32.totalorder %s32, 1
      %p50 = por %p48, %p49
      %p51 = scmp.ne.s32.totalorder %s40, %s41
      %p52 = scmp.eq.s32.totalorder %s32, 0
      %p53 = por %p51, %p52
      %p54 = scmp.ne.s32.totalorder %s40, %s41
      %p55 = scmp.eq.s32.totalorder %s33, 1
      %p56 = por %p54, %p55
      %p58 = scmp.ne.s32.totalorder %s41, %s57
      %p59 = scmp.eq.s32.totalorder %s33, 0
      %p60 = por %p58, %p59
      %s62 = sadd.s32 %s61, 1
      %p65 = scmp.eq.s32.totalorder %s27, 1
      %p66 = scmp.ne.s32.totalorder %s61, %s63
      %p67 = scmp.eq.s32.totalorder %s27, 0
      %p68 = por %p66, %p67
      %p69 = scmp.ne.s32.totalorder %s61, %s63
      %p70 = scmp.eq.s32.totalorder %s32, 1
      %p71 = por %p69, %p70
      %p72 = scmp.ne.s32.totalorder %s63, %s64
      %p73 = scmp.eq.s32.totalorder %s32, 0
      %p74 = por %p72, %p73
      %p75 = scmp.ne.s32.totalorder %s63, %s64
      %p76 = scmp.eq.s32.totalorder %s33, 1
      %p77 = por %p75, %p76
      %p79 = scmp.ne.s32.totalorder %s64, %s78
      %p80 = scmp.eq.s32.totalorder %s33, 0
      %p81 = por %p79, %p80
      %s83 = sadd.s32 %s82, 1
      %p86 = scmp.eq.s32.totalorder %s27, 1
      %p87 = scmp.ne.s32.totalorder %s82, %s84
      %p88 = scmp.eq.s32.totalorder %s27, 0
      %p89 = por %p87, %p88
      %p90 = scmp.ne.s32.totalorder %s82, %s84
      %p91 = scmp.eq.s32.totalorder %s32, 1
      %p92 = por %p90, %p91
      %p93 = scmp.ne.s32.totalorder %s84, %s85
      %p94 = scmp.eq.s32.totalorder %s32, 0
      %p95 = por %p93, %p94
      %p96 = scmp.ne.s32.totalorder %s84, %s85
      %p97 = scmp.eq.s32.totalorder %s33, 1
      %p98 = por %p96, %p97
      %p100 = scmp.ne.s32.totalorder %s85, %s99
      %p101 = scmp.eq.s32.totalorder %s33, 0
      %p102 = por %p100, %p101
      %s104 = sadd.s32 %s103, 1
      %p107 = scmp.eq.s32.totalorder %s27, 1
      %p108 = scmp.ne.s32.totalorder %s103, %s105
      %p109 = scmp.eq.s32.totalorder %s27, 0
      %p110 = por %p108, %p109
      %p111 = scmp.ne.s32.totalorder %s103, %s105
      %p112 = scmp.eq.s32.totalorder %s32, 1
      %p113 = por %p111, %p112
      %p114 = scmp.ne.s32.totalorder %s105, %s106
      %p115 = scmp.eq.s32.totalorder %s32, 0
      %p116 = por %p114, %p115
      %p117 = scmp.ne.s32.totalorder %s105, %s106
      %p118 = scmp.eq.s32.totalorder %s33, 1
      %p119 = por %p117, %p118
      %p121 = scmp.ne.s32.totalorder %s106, %s120
      %p122 = scmp.eq.s32.totalorder %s33, 0
      %p123 = por %p121, %p122
      %s125 = sadd.s32 %s124, 1
      %p128 = scmp.eq.s32.totalorder %s27, 1
      %p129 = scmp.ne.s32.totalorder %s124, %s126
      %p130 = scmp.eq.s32.totalorder %s27, 0
      %p131 = por %p129, %p130
      %p132 = scmp.ne.s32.totalorder %s124, %s126
      %p133 = scmp.eq.s32.totalorder %s32, 1
      %p134 = por %p132, %p133
      %p135 = scmp.ne.s32.totalorder %s126, %s127
      %p136 = scmp.eq.s32.totalorder %s32, 0
      %p137 = por %p135, %p136
      %p138 = scmp.ne.s32.totalorder %s126, %s127
      %p139 = scmp.eq.s32.totalorder %s33, 1
      %p140 = por %p138, %p139
      %p142 = scmp.ne.s32.totalorder %s127, %s141
      %p143 = scmp.eq.s32.totalorder %s33, 0
      %p144 = por %p142, %p143
      %s146 = sadd.s32 %s145, 1
      %p149 = scmp.eq.s32.totalorder %s27, 1
      %p150 = scmp.ne.s32.totalorder %s145, %s147
      %p151 = scmp.eq.s32.totalorder %s27, 0
      %p152 = por %p150, %p151
      %p153 = scmp.ne.s32.totalorder %s145, %s147
      %p154 = scmp.eq.s32.totalorder %s32, 1
      %p155 = por %p153, %p154
      %p156 = scmp.ne.s32.totalorder %s147, %s148
      %p157 = scmp.eq.s32.totalorder %s32, 0
      %p158 = por %p156, %p157
      %p159 = scmp.ne.s32.totalorder %s147, %s148
      %p160 = scmp.eq.s32.totalorder %s33, 1
      %p161 = por %p159, %p160
      %p163 = scmp.ne.s32.totalorder %s148, %s162
      %p164 = scmp.eq.s32.totalorder %s33, 0
      %p165 = por %p163, %p164
      %s167 = sadd.s32 %s166, 1
      %p170 = scmp.eq.s32.totalorder %s27, 1
      %p171 = scmp.ne.s32.totalorder %s166, %s168
      %p172 = scmp.eq.s32.totalorder %s27, 0
      %p173 = por %p171, %p172
      %p174 = scmp.ne.s32.totalorder %s166, %s168
      %p175 = scmp.eq.s32.totalorder %s32, 1
      %p176 = por %p174, %p175
      %p177 = scmp.ne.s32.totalorder %s168, %s169
      %p178 = scmp.eq.s32.totalorder %s32, 0
      %p179 = por %p177, %p178
      %p180 = scmp.ne.s32.totalorder %s168, %s169
      %p181 = scmp.eq.s32.totalorder %s33, 1
      %p182 = por %p180, %p181
      %p184 = scmp.ne.s32.totalorder %s169, %s183
      %p185 = scmp.eq.s32.totalorder %s33, 0
      %p186 = por %p184, %p185
      %s187 = ssub.s32 %s27, %s34
      %p188 = scmp.eq.s32.totalorder %s187, 0
      %s190 = sadd.s32 %s189, 1
      %s191 = scalar_select %p188, %s189, %s190
      %p194 = pneg %p188
      %p195 = scmp.eq.s32.totalorder %s27, 1
      %p196 = por %p194, %p195
      %p197 = scmp.ne.s32.totalorder %s189, %s192
      %p198 = scmp.eq.s32.totalorder %s27, 0
      %p199 = por %p197, %p198
      %p200 = scmp.ne.s32.totalorder %s189, %s192
      %p201 = scmp.eq.s32.totalorder %s32, 1
      %p202 = por %p200, %p201
      %p203 = scmp.ne.s32.totalorder %s192, %s193
      %p204 = scmp.eq.s32.totalorder %s32, 0
      %p205 = por %p203, %p204
      %p206 = scmp.ne.s32.totalorder %s192, %s193
      %p207 = scmp.eq.s32.totalorder %s33, 1
      %p208 = por %p206, %p207
      %p210 = scmp.ne.s32.totalorder %s193, %s209
      %p211 = scmp.eq.s32.totalorder %s33, 0
      %p212 = por %p210, %p211
      %p213 = scmp.le.s32.totalorder 1, %s27
      %p214 = scmp.lt.s32.totalorder %s27, 3
      %p215 = pnand %p213, %p214
      %p216 = pneg %p215
      // Predicated region
      $region9: #{tpu_custom_call.1} parent=5 // pred_check
        _
      $region10: #{tpu_custom_call.1} parent=5 // pred_check_branch
        %218 = sbr.rel (%p215) target = $region12
      $region11: #{tpu_custom_call.1} parent=5 // pred_region
        %s219 = ssub.s32 %s27, 1
        // Predicated region
        $region13: #{tpu_custom_call.1} parent=11 // pred_check
          %p220 = pneg %p74
        $region14: #{tpu_custom_call.1} parent=11 // pred_check_branch
          %222 = sbr.rel (%p220) target = $region16
        $region15: #{tpu_custom_call.1} parent=11 // pred_region
          %224 = vsyncadd [#allocation5], 0
          %s225 = sshll.u32 %s2, 4
          %s226 = int_to_ptr.hbm [resolvable:$true] %s225
          %s227 = sshll.u32 [#allocation4], 4
          %s228 = int_to_ptr.vmem [resolvable:$true] %s227
          %233 = dma.hbm_to_vmem [thread:$0]  %s226, 256, %s228, [#allocation5], 128, 128, 8
        $region16: #{tpu_custom_call.1} parent=11 // pred_fallthru
          _
        // Predicated region
        $region17: #{tpu_custom_call.1} parent=11 // pred_check
          %p234 = pneg %p95
        $region18: #{tpu_custom_call.1} parent=11 // pred_check_branch
          %236 = sbr.rel (%p234) target = $region20
        $region19: #{tpu_custom_call.1} parent=11 // pred_region
          _
        $region20: #{tpu_custom_call.1} parent=11 // pred_fallthru
          _
        // Predicated region
        $region21: #{tpu_custom_call.1} parent=11 // pred_check
          %p237 = pneg %p116
        $region22: #{tpu_custom_call.1} parent=11 // pred_check_branch
          %239 = sbr.rel (%p237) target = $region24
        $region23: #{tpu_custom_call.1} parent=11 // pred_region
          _
        $region24: #{tpu_custom_call.1} parent=11 // pred_fallthru
          _
        // Predicated region
        $region25: #{tpu_custom_call.1} parent=11 // pred_check
          %p240 = pneg %p137
        $region26: #{tpu_custom_call.1} parent=11 // pred_check_branch
          %242 = sbr.rel (%p240) target = $region28
        $region27: #{tpu_custom_call.1} parent=11 // pred_region
          %244 = vsyncadd [#allocation8], 0
          %s245 = sshll.u32 %s5, 4
          %s246 = int_to_ptr.hbm [resolvable:$true] %s245
          %s247 = sshll.u32 [#allocation7], 4
          %s248 = int_to_ptr.vmem [resolvable:$true] %s247
          %253 = dma.hbm_to_vmem [thread:$0]  %s246, 4608, %s248, [#allocation8], 64, 64, 4
        $region28: #{tpu_custom_call.1} parent=11 // pred_fallthru
          _
        // Predicated region
        $region29: #{tpu_custom_call.1} parent=11 // pred_check
          %p254 = pneg %p158
        $region30: #{tpu_custom_call.1} parent=11 // pred_check_branch
          %256 = sbr.rel (%p254) target = $region32
        $region31: #{tpu_custom_call.1} parent=11 // pred_region
          _
        $region32: #{tpu_custom_call.1} parent=11 // pred_fallthru
          _
        // Predicated region
        $region33: #{tpu_custom_call.1} parent=11 // pred_check
          %p257 = pneg %p179
        $region34: #{tpu_custom_call.1} parent=11 // pred_check_branch
          %259 = sbr.rel (%p257) target = $region36
        $region35: #{tpu_custom_call.1} parent=11 // pred_region
          %261 = vsyncadd [#allocation8], 0
          %s262 = sshll.u32 %s7, 4
          %s263 = int_to_ptr.hbm [resolvable:$true] %s262
          %s264 = sshll.u32 [#allocation9], 4
          %s265 = int_to_ptr.vmem [resolvable:$true] %s264
          %270 = dma.hbm_to_vmem [thread:$0]  %s263, 256, %s265, [#allocation8], 128, 128, 8
        $region36: #{tpu_custom_call.1} parent=11 // pred_fallthru
          _
      $region12: #{tpu_custom_call.1} parent=5 // pred_fallthru
        _
      %p271 = scmp.lt.s32.totalorder %s27, 2
      // Predicated region
      $region37: #{tpu_custom_call.1} parent=5 // pred_check
        %p272 = pneg %p271
      $region38: #{tpu_custom_call.1} parent=5 // pred_check_branch
        %274 = sbr.rel (%p272) target = $region40
      $region39: #{tpu_custom_call.1} parent=5 // pred_region
        // Predicated region
        $region41: #{tpu_custom_call.1} parent=39 // pred_check
          %p275 = pneg %p47
        $region42: #{tpu_custom_call.1} parent=39 // pred_check_branch
          %277 = sbr.rel (%p275) target = $region44
        $region43: #{tpu_custom_call.1} parent=39 // pred_region
          %p278 = scmp.lt.s32.totalorder %s27, 1
          %s279 = scalar_select %p278, %s27, 1
          %s280 = smul.addr %s279, 2
          %s281 = smul.addr %s280, 8
          %s282 = scalar_lea.vmem %s1, %s281
        $region44: #{tpu_custom_call.1} parent=39 // pred_fallthru
          _
      $region40: #{tpu_custom_call.1} parent=5 // pred_fallthru
        _
      %p283 = scmp.le.s32.totalorder 1, %s27
      %p284 = scmp.lt.s32.totalorder %s27, 3
      %p285 = pnand %p283, %p284
      %p286 = pneg %p285
      // Predicated region
      $region45: #{tpu_custom_call.1} parent=5 // pred_check
        _
      $region46: #{tpu_custom_call.1} parent=5 // pred_check_branch
        %288 = sbr.rel (%p285) target = $region48
      $region47: #{tpu_custom_call.1} parent=5 // pred_region
        %s289 = ssub.s32 %s27, 1
        // Predicated region
        $region49: #{tpu_custom_call.1} parent=47 // pred_check
          %p290 = pneg %p74
        $region50: #{tpu_custom_call.1} parent=47 // pred_check_branch
          %292 = sbr.rel (%p290) target = $region52
        $region51: #{tpu_custom_call.1} parent=47 // pred_region
          %294 = dma.done [#allocation5], 256
        $region52: #{tpu_custom_call.1} parent=47 // pred_fallthru
          _
        // Predicated region
        $region53: #{tpu_custom_call.1} parent=47 // pred_check
          %p295 = pneg %p137
        $region54: #{tpu_custom_call.1} parent=47 // pred_check_branch
          %297 = sbr.rel (%p295) target = $region56
        $region55: #{tpu_custom_call.1} parent=47 // pred_region
          %299 = dma.done [#allocation8], 4608
        $region56: #{tpu_custom_call.1} parent=47 // pred_fallthru
          _
        // Predicated region
        $region57: #{tpu_custom_call.1} parent=47 // pred_check
          %p300 = pneg %p179
        $region58: #{tpu_custom_call.1} parent=47 // pred_check_branch
          %302 = sbr.rel (%p300) target = $region60
        $region59: #{tpu_custom_call.1} parent=47 // pred_region
          %304 = dma.done [#allocation8], 256
        $region60: #{tpu_custom_call.1} parent=47 // pred_fallthru
          _
        %p305 = scmp.lt.s32.totalorder %s32, 1
        %s306 = scalar_select %p305, %s32, 1
        %s307 = smul.addr %s306, 2
        %s308 = smul.addr %s307, 8
        %s309 = scalar_lea.vmem %s1, %s308
        %p310 = pneg %p53
        %p311 = pneg %p50
        %p312 = pneg %p74
        %p313 = pneg %p71
        %p314 = pneg %p95
        %p315 = pneg %p92
        %p316 = pneg %p116
        %p317 = pneg %p113
        %p318 = pneg %p137
        %p319 = pneg %p134
        %p320 = pneg %p158
        %p321 = pneg %p155
        %p322 = pneg %p179
        %p323 = pneg %p176
        %p324 = pneg %p205
        %p325 = pneg %p202
        %s326 = sand.u32 %s192, 1
        %s327 = scalar_lea.sflag [#allocation6], %s326
        %s328 = sand.u32 %s192, 1
        %s329 = smul.addr %s328, 16
        %s330 = scalar_lea.vmem [#allocation10], %s329
        %p331 = scmp.lt.s32.totalorder %s32, 1
        %s332 = scalar_select %p331, %s32, 1
        %s333 = smul.addr %s332, 2
        %s334 = smul.addr %s333, 8
        %s335 = scalar_lea.vmem %s1, %s334
        %s337 = sld [smem:[#allocation3 + %s32]]
        %v338 = vlaneseq
        %v339 = vand.u32 %v338, 127
        %v340 = vstv %s337
        %vm341 = vcmp.ge.s32.totalorder %v339, %v340
        %v342 = vsel %vm341, -1e+09, 0.0
        %v343 = vlaneseq
        %v344 = vshrl.u32 %v343, 7
        %v345 = vadd.s32 %v344, 8
        %vm346 = vcmp.lt.s32.totalorder %v344, %v340
        %vm347 = vcmp.lt.s32.totalorder %v345, %v340
        %v348 = vsel %vm346, 1, 0
        %v349 = vsel %vm347, 1, 0
        %v350 = vcvt.s32.f32 %v348
        %v351 = vcvt.s32.f32 %v349
        %v352 = vld [vmem:[%s335] sm:$0xff]
        %v353 = vld [vmem:[%s335 + $0x8] sm:$0xff]
        %v354 = vld [vmem:[#allocation4] sm:$0xff]
        %v355 = vld [vmem:[#allocation4 + $0x8] sm:$0xff]
        %v356 = vadd.f32 %v352, %v354
        %v357 = vadd.f32 %v353, %v355
        %v358 = vld [vmem:[#allocation9] sm:$0xff]
        %v359 = vpack.c.bf16 %v357, %v356
        %v360 = vld [vmem:[%s3] sm:$0xf]
        %v361 = vld [vmem:[%s3 + $0x4] sm:$0xf]
        %v362 = vld [vmem:[%s3 + $0x8] sm:$0xf]
        %v363 = vld [vmem:[%s3 + $0xc] sm:$0xf]
        %v364 = vperm.slane %v358, 0
        %v369 = vunpack.c.l.b16 %v360
        %v370 = vunpack.c.l.b16 %v361
        %v371 = vunpack.c.l.b16 %v362
        %v372 = vunpack.c.l.b16 %v363
        %v373 = vpack.c.b16 %v370, %v369
        %v374 = vpack.c.b16 %v372, %v371
        %vm377 = vcmask 261120
        %v379 = vsel %vm377, %v359, 0
        %381 = vmatpush.bf16.msra.mxu0 0
        %382 = vmatpush.bf16.msra.mxu0 0
        %383 = vmatpush.bf16.msra.mxu0 0
        %384 = vmatpush.bf16.msra.mxu0 0
        %385 = vmatpush.bf16.msra.mxu0 0
        %386 = vmatpush.bf16.msra.mxu0 0
        %387 = vmatpush.bf16.msra.mxu0 %v374
        %388 = vmatpush.bf16.msra.mxu0 %v373
        %389 = vmatmul.bf16.gmra.mxu0 %v379
        %v390 = vpop.f32.mrf.mxu0
        %v391 = vadd.f32 %v364, %v390
        %v392 = vpop.f32.mrf.mxu0
        %v393 = vadd.f32 %v364, %v392
        %394 = vdwg.mxu0
        %v395 = vpack.c.bf16 %v393, %v391
        %398 = vrot.lane.b32.xlu0 %v391, 96
        %v399 = vpop.permute.xlu0 %398
        %400 = vrot.lane.b32.xlu0 %v393, 96
        %v401 = vpop.permute.xlu0 %400
        %404 = vxpose.xlu0.b32.start [1/16] %v399, 128
        %405 = vxpose.xlu0.b32.cont [2/16] %v401, 128
        %406 = vxpose.xlu0.b32.cont [3/16] 0.0, 128
        %407 = vxpose.xlu0.b32.cont [4/16] 0.0, 128
        %408 = vxpose.xlu0.b32.cont [5/16] 0.0, 128
        %409 = vxpose.xlu0.b32.cont [6/16] 0.0, 128
        %410 = vxpose.xlu0.b32.cont [7/16] 0.0, 128
        %411 = vxpose.xlu0.b32.cont [8/16] 0.0, 128
        %412 = vxpose.xlu0.b32.cont [9/16] 0.0, 128
        %413 = vxpose.xlu0.b32.cont [10/16] 0.0, 128
        %414 = vxpose.xlu0.b32.cont [11/16] 0.0, 128
        %415 = vxpose.xlu0.b32.cont [12/16] 0.0, 128
        %416 = vxpose.xlu0.b32.cont [13/16] 0.0, 128
        %417 = vxpose.xlu0.b32.cont [14/16] 0.0, 128
        %418 = vxpose.xlu0.b32.cont [15/16] 0.0, 128
        %419 = vxpose.xlu0.b32.end [16/16] 0.0, 128
        %v420 = vpop.trf.xlu0
        %v421 = vpop.trf.xlu0
        %v422 = vpop.trf.xlu0
        %v423 = vpop.trf.xlu0
        %v424 = vpop.trf.xlu0
        %v425 = vpop.trf.xlu0
        %v426 = vpop.trf.xlu0
        %v427 = vpop.trf.xlu0
        %v428 = vpop.trf.xlu0
        %v429 = vpop.trf.xlu0
        %v430 = vpop.trf.xlu0
        %v431 = vpop.trf.xlu0
        %v432 = vpop.trf.xlu0
        %v433 = vpop.trf.xlu0
        %v434 = vpop.trf.xlu0
        %v435 = vpop.trf.xlu0
        %v436 = vpack.c.bf16 %v421, %v420
        %vm437 = vcmask 130048
        %v439 = vsel %vm437, %v395, 0
        %441 = vmatpush.bf16.msra.mxu0 0
        %442 = vmatpush.bf16.msra.mxu0 0
        %443 = vmatpush.bf16.msra.mxu0 0
        %444 = vmatpush.bf16.msra.mxu0 0
        %445 = vmatpush.bf16.msra.mxu0 0
        %446 = vmatpush.bf16.msra.mxu0 0
        %447 = vmatpush.bf16.msra.mxu0 0
        %448 = vmatpush.bf16.msra.mxu0 %v436
        %449 = vmatmul.bf16.gmra.mxu0 %v439
        %v450 = vpop.f32.mrf.mxu0
        %v451 = vadd.f32 0.0, %v450
        %v452 = vpop.f32.mrf.mxu0
        %v453 = vadd.f32 0.0, %v452
        %454 = vdwg.mxu0
        %v455 = vmul.f32 %v451, 0.25
        %v456 = vmul.f32 %v453, 0.25
        %v457 = vadd.f32 %v455, %v342
        %v458 = vadd.f32 %v456, %v342
        %v459 = vsel %vm437, %v457, -inf
        %460 = vmax.xlane.f32.xlu0 %v459
        %v461 = vpop.xlane.xlu0 %460
        %v462 = vsel %vm437, %v458, -inf
        %463 = vmax.xlane.f32.xlu0 %v462
        %v464 = vpop.xlane.xlu0 %463
        %v465 = vsub.f32 %v457, %v461
        %v466 = vsub.f32 %v458, %v464
        %v467 = vmul.f32 %v465, 1.442695
        %v468 = vpow.pop %v467
        %v469 = vmul.f32 %v466, 1.442695
        %v470 = vpow.pop %v469
        %v471 = vsel %vm437, %v468, 0.0
        %472 = vadd.xlane.f32.xlu0 %v471
        %v473 = vpop.xlane.xlu0 %472
        %v474 = vsel %vm437, %v470, 0.0
        %475 = vadd.xlane.f32.xlu0 %v474
        %v476 = vpop.xlane.xlu0 %475
        %v477 = vrcp.pop %v473
        %v478 = vrcp.pop %v476
        %v479 = vmul.f32 %v468, %v477
        %v480 = vmul.f32 %v470, %v478
        %v481 = vpack.c.bf16 %v480, %v479
        %483 = vrot.lane.b32.xlu0 %v395, 64
        %v484 = vpop.permute.xlu0 %483
        %v487 = vsel %vm437, %v481, 0
        %489 = vmatpush.bf16.msra.mxu0 0
        %490 = vmatpush.bf16.msra.mxu0 0
        %491 = vmatpush.bf16.msra.mxu0 0
        %492 = vmatpush.bf16.msra.mxu0 0
        %493 = vmatpush.bf16.msra.mxu0 0
        %494 = vmatpush.bf16.msra.mxu0 0
        %495 = vmatpush.bf16.msra.mxu0 0
        %496 = vmatpush.bf16.msra.mxu0 %v484
        %497 = vmatmul.bf16.gmra.mxu0 %v487
        %v498 = vpop.f32.mrf.mxu0
        %v499 = vadd.f32 0.0, %v498
        %v500 = vpop.f32.mrf.mxu0
        %v501 = vadd.f32 0.0, %v500
        %502 = vdwg.mxu0
        %503 = vrot.lane.b32.xlu0 %v391, 80
        %v504 = vpop.permute.xlu0 %503
        %505 = vrot.lane.b32.xlu0 %v393, 80
        %v506 = vpop.permute.xlu0 %505
        %509 = vxpose.xlu0.b32.start [1/16] %v504, 128
        %510 = vxpose.xlu0.b32.cont [2/16] %v506, 128
        %511 = vxpose.xlu0.b32.cont [3/16] 0.0, 128
        %512 = vxpose.xlu0.b32.cont [4/16] 0.0, 128
        %513 = vxpose.xlu0.b32.cont [5/16] 0.0, 128
        %514 = vxpose.xlu0.b32.cont [6/16] 0.0, 128
        %515 = vxpose.xlu0.b32.cont [7/16] 0.0, 128
        %516 = vxpose.xlu0.b32.cont [8/16] 0.0, 128
        %517 = vxpose.xlu0.b32.cont [9/16] 0.0, 128
        %518 = vxpose.xlu0.b32.cont [10/16] 0.0, 128
        %519 = vxpose.xlu0.b32.cont [11/16] 0.0, 128
        %520 = vxpose.xlu0.b32.cont [12/16] 0.0, 128
        %521 = vxpose.xlu0.b32.cont [13/16] 0.0, 128
        %522 = vxpose.xlu0.b32.cont [14/16] 0.0, 128
        %523 = vxpose.xlu0.b32.cont [15/16] 0.0, 128
        %524 = vxpose.xlu0.b32.end [16/16] 0.0, 128
        %v525 = vpop.trf.xlu0
        %v526 = vpop.trf.xlu0
        %v527 = vpop.trf.xlu0
        %v528 = vpop.trf.xlu0
        %v529 = vpop.trf.xlu0
        %v530 = vpop.trf.xlu0
        %v531 = vpop.trf.xlu0
        %v532 = vpop.trf.xlu0
        %v533 = vpop.trf.xlu0
        %v534 = vpop.trf.xlu0
        %v535 = vpop.trf.xlu0
        %v536 = vpop.trf.xlu0
        %v537 = vpop.trf.xlu0
        %v538 = vpop.trf.xlu0
        %v539 = vpop.trf.xlu0
        %v540 = vpop.trf.xlu0
        %v541 = vpack.c.bf16 %v526, %v525
        %542 = vrot.lane.b32.xlu0 %v395, 112
        %v543 = vpop.permute.xlu0 %542
        %v545 = vsel %vm437, %v543, 0
        %547 = vmatpush.bf16.msra.mxu0 0
        %548 = vmatpush.bf16.msra.mxu0 0
        %549 = vmatpush.bf16.msra.mxu0 0
        %550 = vmatpush.bf16.msra.mxu0 0
        %551 = vmatpush.bf16.msra.mxu0 0
        %552 = vmatpush.bf16.msra.mxu0 0
        %553 = vmatpush.bf16.msra.mxu0 0
        %554 = vmatpush.bf16.msra.mxu0 %v541
        %555 = vmatmul.bf16.gmra.mxu0 %v545
        %v556 = vpop.f32.mrf.mxu0
        %v557 = vadd.f32 0.0, %v556
        %v558 = vpop.f32.mrf.mxu0
        %v559 = vadd.f32 0.0, %v558
        %560 = vdwg.mxu0
        %v561 = vmul.f32 %v557, 0.25
        %v562 = vmul.f32 %v559, 0.25
        %v563 = vadd.f32 %v561, %v342
        %v564 = vadd.f32 %v562, %v342
        %v565 = vsel %vm437, %v563, -inf
        %566 = vmax.xlane.f32.xlu0 %v565
        %v567 = vpop.xlane.xlu0 %566
        %v568 = vsel %vm437, %v564, -inf
        %569 = vmax.xlane.f32.xlu0 %v568
        %v570 = vpop.xlane.xlu0 %569
        %v571 = vsub.f32 %v563, %v567
        %v572 = vsub.f32 %v564, %v570
        %v573 = vmul.f32 %v571, 1.442695
        %v574 = vpow.pop %v573
        %v575 = vmul.f32 %v572, 1.442695
        %v576 = vpow.pop %v575
        %v577 = vsel %vm437, %v574, 0.0
        %578 = vadd.xlane.f32.xlu0 %v577
        %v579 = vpop.xlane.xlu0 %578
        %v580 = vsel %vm437, %v576, 0.0
        %581 = vadd.xlane.f32.xlu0 %v580
        %v582 = vpop.xlane.xlu0 %581
        %v583 = vrcp.pop %v579
        %v584 = vrcp.pop %v582
        %v585 = vmul.f32 %v574, %v583
        %v586 = vmul.f32 %v576, %v584
        %v587 = vpack.c.bf16 %v586, %v585
        %588 = vrot.lane.b32.xlu0 %v395, 48
        %v589 = vpop.permute.xlu0 %588
        %v592 = vsel %vm437, %v587, 0
        %594 = vmatpush.bf16.msra.mxu0 0
        %595 = vmatpush.bf16.msra.mxu0 0
        %596 = vmatpush.bf16.msra.mxu0 0
        %597 = vmatpush.bf16.msra.mxu0 0
        %598 = vmatpush.bf16.msra.mxu0 0
        %599 = vmatpush.bf16.msra.mxu0 0
        %600 = vmatpush.bf16.msra.mxu0 0
        %601 = vmatpush.bf16.msra.mxu0 %v589
        %602 = vmatmul.bf16.gmra.mxu0 %v592
        %v603 = vpop.f32.mrf.mxu0
        %v604 = vadd.f32 0.0, %v603
        %v605 = vpop.f32.mrf.mxu0
        %v606 = vadd.f32 0.0, %v605
        %607 = vdwg.mxu0
        %610 = vrot.lane.b32.xlu0 %v604, 16
        %v611 = vpop.permute.xlu0 %610
        %612 = vrot.lane.b32.xlu0 %v606, 16
        %v613 = vpop.permute.xlu0 %612
        %v616 = vsel %vm437, %v499, %v611
        %v617 = vsel %vm437, %v501, %v613
        %v618 = vpack.c.bf16 %v617, %v616
        %v619 = vld [vmem:[%s4] sm:$0xf]
        %v620 = vld [vmem:[%s4 + $0x4] sm:$0xf]
        %v621 = vld [vmem:[%s4 + $0x8] sm:$0xf]
        %v622 = vld [vmem:[%s4 + $0xc] sm:$0xf]
        %v623 = vperm.slane %v358, 1
        %v628 = vunpack.c.l.b16 %v619
        %v629 = vunpack.c.l.b16 %v620
        %v630 = vunpack.c.l.b16 %v621
        %v631 = vunpack.c.l.b16 %v622
        %v632 = vpack.c.b16 %v629, %v628
        %v633 = vpack.c.b16 %v631, %v630
        %v637 = vsel %vm377, %v618, 0
        %639 = vmatpush.bf16.msra.mxu0 0
        %640 = vmatpush.bf16.msra.mxu0 0
        %641 = vmatpush.bf16.msra.mxu0 0
        %642 = vmatpush.bf16.msra.mxu0 0
        %643 = vmatpush.bf16.msra.mxu0 0
        %644 = vmatpush.bf16.msra.mxu0 0
        %645 = vmatpush.bf16.msra.mxu0 %v633
        %646 = vmatpush.bf16.msra.mxu0 %v632
        %647 = vmatmul.bf16.gmra.mxu0 %v637
        %v648 = vpop.f32.mrf.mxu0
        %v649 = vadd.f32 %v623, %v648
        %v650 = vpop.f32.mrf.mxu0
        %v651 = vadd.f32 %v623, %v650
        %652 = vdwg.mxu0
        %v653 = vadd.f32 %v649, %v356
        %v654 = vadd.f32 %v651, %v357
        %v655 = vsel %vm377, %v653, 0.0
        %656 = vadd.xlane.f32.xlu0 %v655
        %v657 = vpop.xlane.xlu0 %656
        %v658 = vsel %vm377, %v654, 0.0
        %659 = vadd.xlane.f32.xlu0 %v658
        %v660 = vpop.xlane.xlu0 %659
        %v661 = vrcp.pop 32.0
        %v662 = vmul.f32 32.0, %v661
        %v663 = vsub.f32 1.0, %v662
        %v664 = vmul.f32 %v661, %v663
        %v665 = vadd.f32 %v661, %v664
        %vm666 = vweird.f32 %v661
        %v667 = vsel %vm666, %v661, %v665
        %v668 = vmul.f32 %v657, %v667
        %v669 = vmul.f32 %v660, %v667
        %v670 = vsub.f32 %v653, %v668
        %v671 = vsub.f32 %v654, %v669
        %v672 = vmul.f32 %v670, %v670
        %v673 = vmul.f32 %v671, %v671
        %v674 = vsel %vm377, %v672, 0.0
        %675 = vadd.xlane.f32.xlu0 %v674
        %v676 = vpop.xlane.xlu0 %675
        %v677 = vsel %vm377, %v673, 0.0
        %678 = vadd.xlane.f32.xlu0 %v677
        %v679 = vpop.xlane.xlu0 %678
        %v680 = vmul.f32 %v676, %v667
        %v681 = vmul.f32 %v679, %v667
        %v682 = vadd.f32 %v680, 1e-05
        %v683 = vadd.f32 %v681, 1e-05
        %v684 = vrsqrt.pop %v682
        %v685 = vmul.f32 %v684, %v682
        %v686 = vmul.f32 %v685, %v684
        %v687 = vmul.f32 0.5, %v686
        %v688 = vsub.f32 1.5, %v687
        %v689 = vmul.f32 %v684, %v688
        %vm690 = vweird.f32 %v682
        %vm691 = vweird.f32 %v684
        %vm692 = vmor %vm690, %vm691
        %v693 = vsel %vm692, %v684, %v689
        %v694 = vrsqrt.pop %v683
        %v695 = vmul.f32 %v694, %v683
        %v696 = vmul.f32 %v695, %v694
        %v697 = vmul.f32 0.5, %v696
        %v698 = vsub.f32 1.5, %v697
        %v699 = vmul.f32 %v694, %v698
        %vm700 = vweird.f32 %v683
        %vm701 = vweird.f32 %v694
        %vm702 = vmor %vm700, %vm701
        %v703 = vsel %vm702, %v694, %v699
        %v704 = vmul.f32 %v670, %v693
        %v705 = vmul.f32 %v671, %v703
        %v706 = vperm.slane %v358, 2
        %v707 = vmul.f32 %v704, %v706
        %v708 = vmul.f32 %v705, %v706
        %v709 = vperm.slane %v358, 3
        %v710 = vadd.f32 %v707, %v709
        %v711 = vadd.f32 %v708, %v709
        %v712 = vmul.f32 %v710, %v350
        %v713 = vmul.f32 %v711, %v351
        %vm716 = vcmask 1043456
        %v717 = vrot.slane %v712, 4
        %v718 = vrot.slane %v713, 4
        %v719 = vsel %vm716, %v717, %v718
        %v723 = vsel %vm716, 0.0, %v717
        %v724 = vsel %vm716, %v718, 0.0
        %v725 = vpack.c.bf16 %v723, %v723
        %v726 = vpack.c.bf16 %v719, %v719
        %v727 = vpack.c.bf16 %v724, %v724
        %v728 = vld [vmem:[#allocation7] sm:$0xf]
        %v729 = vld [vmem:[#allocation7 + $0x4] sm:$0xf]
        %v730 = vld [vmem:[#allocation7 + $0x8] sm:$0xf]
        %v731 = vld [vmem:[#allocation7 + $0xc] sm:$0xf]
        %s732 = scalar_lea.vmem [#allocation7], 16
        %v733 = vld [vmem:[%s732] sm:$0xf]
        %v734 = vld [vmem:[%s732 + $0x4] sm:$0xf]
        %v735 = vld [vmem:[%s732 + $0x8] sm:$0xf]
        %v736 = vld [vmem:[%s732 + $0xc] sm:$0xf]
        %v740 = vunpack.c.l.b16 %v725
        %v741 = vunpack.c.l.b16 %v726
        %v742 = vunpack.c.l.b16 %v727
        %v743 = vpack.c.b16 %v741, %v740
        %v744 = vpack.c.b16 %v742, %v742
        %vm745 = vsmask.f32 7424
        %v747 = vshrl.u32 %v743, 16
        %v749 = vshll.u32 %v743, 16
        %v751 = vrot.slane %v749, 1
        %v752 = vor.u32 %v747, %v751
        %v754 = vshll.u32 %v744, 16
        %v756 = vrot.slane %v754, 1
        %v757 = vsel %vm745, %v752, %v756
        %v762 = vunpack.c.l.b16 %v733
        %v763 = vunpack.c.l.b16 %v734
        %v764 = vunpack.c.l.b16 %v735
        %v765 = vunpack.c.l.b16 %v736
        %v766 = vpack.c.b16 %v763, %v762
        %v767 = vpack.c.b16 %v765, %v764
        %v771 = vsel %vm377, %v757, 0
        %773 = vmatpush.bf16.msra.mxu0 0
        %774 = vmatpush.bf16.msra.mxu0 0
        %775 = vmatpush.bf16.msra.mxu0 0
        %776 = vmatpush.bf16.msra.mxu0 0
        %777 = vmatpush.bf16.msra.mxu0 0
        %778 = vmatpush.bf16.msra.mxu0 0
        %779 = vmatpush.bf16.msra.mxu0 %v767
        %780 = vmatpush.bf16.msra.mxu0 %v766
        %781 = vmatmul.bf16.gmra.mxu0 %v771
        %v782 = vpop.f32.mrf.mxu0
        %v783 = vadd.f32 0.0, %v782
        %v784 = vpop.f32.mrf.mxu0
        %v785 = vadd.f32 0.0, %v784
        %786 = vdwg.mxu0
        %v791 = vunpack.c.l.b16 %v728
        %v792 = vunpack.c.l.b16 %v729
        %v793 = vunpack.c.l.b16 %v730
        %v794 = vunpack.c.l.b16 %v731
        %v795 = vpack.c.b16 %v792, %v791
        %v796 = vpack.c.b16 %v794, %v793
        %v799 = vsel %vm377, %v743, 0
        %801 = vmatpush.bf16.msra.mxu0 0
        %802 = vmatpush.bf16.msra.mxu0 0
        %803 = vmatpush.bf16.msra.mxu0 0
        %804 = vmatpush.bf16.msra.mxu0 0
        %805 = vmatpush.bf16.msra.mxu0 0
        %806 = vmatpush.bf16.msra.mxu0 0
        %807 = vmatpush.bf16.msra.mxu0 %v796
        %808 = vmatpush.bf16.msra.mxu0 %v795
        %809 = vmatmul.bf16.gmra.mxu0 %v799
        %v810 = vpop.f32.mrf.mxu0
        %v811 = vadd.f32 %v783, %v810
        %v812 = vpop.f32.mrf.mxu0
        %v813 = vadd.f32 %v785, %v812
        %814 = vdwg.mxu0
        %s815 = scalar_lea.vmem [#allocation7], 32
        %v816 = vld [vmem:[%s815] sm:$0xf]
        %v817 = vld [vmem:[%s815 + $0x4] sm:$0xf]
        %v818 = vld [vmem:[%s815 + $0x8] sm:$0xf]
        %v819 = vld [vmem:[%s815 + $0xc] sm:$0xf]
        %vm820 = vcmask 1046528
        %v821 = vrot.slane %v743, 1
        %v822 = vrot.slane %v744, 1
        %v823 = vsel %vm820, %v821, %v822
        %v828 = vunpack.c.l.b16 %v816
        %v829 = vunpack.c.l.b16 %v817
        %v830 = vunpack.c.l.b16 %v818
        %v831 = vunpack.c.l.b16 %v819
        %v832 = vpack.c.b16 %v829, %v828
        %v833 = vpack.c.b16 %v831, %v830
        %v837 = vsel %vm377, %v823, 0
        %839 = vmatpush.bf16.msra.mxu0 0
        %840 = vmatpush.bf16.msra.mxu0 0
        %841 = vmatpush.bf16.msra.mxu0 0
        %842 = vmatpush.bf16.msra.mxu0 0
        %843 = vmatpush.bf16.msra.mxu0 0
        %844 = vmatpush.bf16.msra.mxu0 0
        %845 = vmatpush.bf16.msra.mxu0 %v833
        %846 = vmatpush.bf16.msra.mxu0 %v832
        %847 = vmatmul.bf16.gmra.mxu0 %v837
        %v848 = vpop.f32.mrf.mxu0
        %v849 = vadd.f32 0.0, %v848
        %v850 = vpop.f32.mrf.mxu0
        %v851 = vadd.f32 0.0, %v850
        %852 = vdwg.mxu0
        %v853 = vadd.f32 %v811, %v849
        %v854 = vadd.f32 %v813, %v851
        %s855 = scalar_lea.vmem [#allocation7], 48
        %v856 = vld [vmem:[%s855] sm:$0xf]
        %v857 = vld [vmem:[%s855 + $0x4] sm:$0xf]
        %v858 = vld [vmem:[%s855 + $0x8] sm:$0xf]
        %v859 = vld [vmem:[%s855 + $0xc] sm:$0xf]
        %vm860 = vsmask.f32 6400
        %v861 = vrot.slane %v747, 1
        %v862 = vrot.slane %v749, 2
        %v863 = vor.u32 %v861, %v862
        %v864 = vshrl.u32 %v744, 16
        %v866 = vrot.slane %v864, 1
        %v867 = vrot.slane %v754, 2
        %v868 = vor.u32 %v866, %v867
        %v869 = vsel %vm860, %v863, %v868
        %v874 = vunpack.c.l.b16 %v856
        %v875 = vunpack.c.l.b16 %v857
        %v876 = vunpack.c.l.b16 %v858
        %v877 = vunpack.c.l.b16 %v859
        %v878 = vpack.c.b16 %v875, %v874
        %v879 = vpack.c.b16 %v877, %v876
        %v883 = vsel %vm377, %v869, 0
        %885 = vmatpush.bf16.msra.mxu0 0
        %886 = vmatpush.bf16.msra.mxu0 0
        %887 = vmatpush.bf16.msra.mxu0 0
        %888 = vmatpush.bf16.msra.mxu0 0
        %889 = vmatpush.bf16.msra.mxu0 0
        %890 = vmatpush.bf16.msra.mxu0 0
        %891 = vmatpush.bf16.msra.mxu0 %v879
        %892 = vmatpush.bf16.msra.mxu0 %v878
        %893 = vmatmul.bf16.gmra.mxu0 %v883
        %v894 = vpop.f32.mrf.mxu0
        %v895 = vadd.f32 0.0, %v894
        %v896 = vpop.f32.mrf.mxu0
        %v897 = vadd.f32 0.0, %v896
        %898 = vdwg.mxu0
        %v899 = vadd.f32 %v853, %v895
        %v900 = vadd.f32 %v854, %v897
        %s901 = scalar_lea.vmem [#allocation7], 64
        %v902 = vld [vmem:[%s901] sm:$0xf]
        %v903 = vld [vmem:[%s901 + $0x4] sm:$0xf]
        %v904 = vld [vmem:[%s901 + $0x8] sm:$0xf]
        %v905 = vld [vmem:[%s901 + $0xc] sm:$0xf]
        %vm906 = vcmask 1045504
        %v907 = vrot.slane %v743, 2
        %v908 = vrot.slane %v744, 2
        %v909 = vsel %vm906, %v907, %v908
        %v914 = vunpack.c.l.b16 %v902
        %v915 = vunpack.c.l.b16 %v903
        %v916 = vunpack.c.l.b16 %v904
        %v917 = vunpack.c.l.b16 %v905
        %v918 = vpack.c.b16 %v915, %v914
        %v919 = vpack.c.b16 %v917, %v916
        %v923 = vsel %vm377, %v909, 0
        %925 = vmatpush.bf16.msra.mxu0 0
        %926 = vmatpush.bf16.msra.mxu0 0
        %927 = vmatpush.bf16.msra.mxu0 0
        %928 = vmatpush.bf16.msra.mxu0 0
        %929 = vmatpush.bf16.msra.mxu0 0
        %930 = vmatpush.bf16.msra.mxu0 0
        %931 = vmatpush.bf16.msra.mxu0 %v919
        %932 = vmatpush.bf16.msra.mxu0 %v918
        %933 = vmatmul.bf16.gmra.mxu0 %v923
        %v934 = vpop.f32.mrf.mxu0
        %v935 = vadd.f32 0.0, %v934
        %v936 = vpop.f32.mrf.mxu0
        %v937 = vadd.f32 0.0, %v936
        %938 = vdwg.mxu0
        %v939 = vadd.f32 %v899, %v935
        %v940 = vadd.f32 %v900, %v937
        %s941 = scalar_lea.vmem [#allocation7], 80
        %v942 = vld [vmem:[%s941] sm:$0xf]
        %v943 = vld [vmem:[%s941 + $0x4] sm:$0xf]
        %v944 = vld [vmem:[%s941 + $0x8] sm:$0xf]
        %v945 = vld [vmem:[%s941 + $0xc] sm:$0xf]
        %vm946 = vsmask.f32 5376
        %v947 = vrot.slane %v747, 2
        %v948 = vrot.slane %v749, 3
        %v949 = vor.u32 %v947, %v948
        %v950 = vrot.slane %v864, 2
        %v951 = vrot.slane %v754, 3
        %v952 = vor.u32 %v950, %v951
        %v953 = vsel %vm946, %v949, %v952
        %v958 = vunpack.c.l.b16 %v942
        %v959 = vunpack.c.l.b16 %v943
        %v960 = vunpack.c.l.b16 %v944
        %v961 = vunpack.c.l.b16 %v945
        %v962 = vpack.c.b16 %v959, %v958
        %v963 = vpack.c.b16 %v961, %v960
        %v967 = vsel %vm377, %v953, 0
        %969 = vmatpush.bf16.msra.mxu0 0
        %970 = vmatpush.bf16.msra.mxu0 0
        %971 = vmatpush.bf16.msra.mxu0 0
        %972 = vmatpush.bf16.msra.mxu0 0
        %973 = vmatpush.bf16.msra.mxu0 0
        %974 = vmatpush.bf16.msra.mxu0 0
        %975 = vmatpush.bf16.msra.mxu0 %v963
        %976 = vmatpush.bf16.msra.mxu0 %v962
        %977 = vmatmul.bf16.gmra.mxu0 %v967
        %v978 = vpop.f32.mrf.mxu0
        %v979 = vadd.f32 0.0, %v978
        %v980 = vpop.f32.mrf.mxu0
        %v981 = vadd.f32 0.0, %v980
        %982 = vdwg.mxu0
        %v983 = vadd.f32 %v939, %v979
        %v984 = vadd.f32 %v940, %v981
        %s985 = scalar_lea.vmem [#allocation7], 96
        %v986 = vld [vmem:[%s985] sm:$0xf]
        %v987 = vld [vmem:[%s985 + $0x4] sm:$0xf]
        %v988 = vld [vmem:[%s985 + $0x8] sm:$0xf]
        %v989 = vld [vmem:[%s985 + $0xc] sm:$0xf]
        %vm990 = vcmask 1044480
        %v991 = vrot.slane %v743, 3
        %v992 = vrot.slane %v744, 3
        %v993 = vsel %vm990, %v991, %v992
        %v998 = vunpack.c.l.b16 %v986
        %v999 = vunpack.c.l.b16 %v987
        %v1000 = vunpack.c.l.b16 %v988
        %v1001 = vunpack.c.l.b16 %v989
        %v1002 = vpack.c.b16 %v999, %v998
        %v1003 = vpack.c.b16 %v1001, %v1000
        %v1007 = vsel %vm377, %v993, 0
        %1009 = vmatpush.bf16.msra.mxu0 0
        %1010 = vmatpush.bf16.msra.mxu0 0
        %1011 = vmatpush.bf16.msra.mxu0 0
        %1012 = vmatpush.bf16.msra.mxu0 0
        %1013 = vmatpush.bf16.msra.mxu0 0
        %1014 = vmatpush.bf16.msra.mxu0 0
        %1015 = vmatpush.bf16.msra.mxu0 %v1003
        %1016 = vmatpush.bf16.msra.mxu0 %v1002
        %1017 = vmatmul.bf16.gmra.mxu0 %v1007
        %v1018 = vpop.f32.mrf.mxu0
        %v1019 = vadd.f32 0.0, %v1018
        %v1020 = vpop.f32.mrf.mxu0
        %v1021 = vadd.f32 0.0, %v1020
        %1022 = vdwg.mxu0
        %v1023 = vadd.f32 %v983, %v1019
        %v1024 = vadd.f32 %v984, %v1021
        %s1025 = scalar_lea.vmem [#allocation7], 112
        %v1026 = vld [vmem:[%s1025] sm:$0xf]
        %v1027 = vld [vmem:[%s1025 + $0x4] sm:$0xf]
        %v1028 = vld [vmem:[%s1025 + $0x8] sm:$0xf]
        %v1029 = vld [vmem:[%s1025 + $0xc] sm:$0xf]
        %vm1030 = vsmask.f32 4352
        %v1031 = vrot.slane %v747, 3
        %v1032 = vrot.slane %v749, 4
        %v1033 = vor.u32 %v1031, %v1032
        %v1034 = vrot.slane %v864, 3
        %v1035 = vrot.slane %v754, 4
        %v1036 = vor.u32 %v1034, %v1035
        %v1037 = vsel %vm1030, %v1033, %v1036
        %v1042 = vunpack.c.l.b16 %v1026
        %v1043 = vunpack.c.l.b16 %v1027
        %v1044 = vunpack.c.l.b16 %v1028
        %v1045 = vunpack.c.l.b16 %v1029
        %v1046 = vpack.c.b16 %v1043, %v1042
        %v1047 = vpack.c.b16 %v1045, %v1044
        %v1051 = vsel %vm377, %v1037, 0
        %1053 = vmatpush.bf16.msra.mxu0 0
        %1054 = vmatpush.bf16.msra.mxu0 0
        %1055 = vmatpush.bf16.msra.mxu0 0
        %1056 = vmatpush.bf16.msra.mxu0 0
        %1057 = vmatpush.bf16.msra.mxu0 0
        %1058 = vmatpush.bf16.msra.mxu0 0
        %1059 = vmatpush.bf16.msra.mxu0 %v1047
        %1060 = vmatpush.bf16.msra.mxu0 %v1046
        %1061 = vmatmul.bf16.gmra.mxu0 %v1051
        %v1062 = vpop.f32.mrf.mxu0
        %v1063 = vadd.f32 0.0, %v1062
        %v1064 = vpop.f32.mrf.mxu0
        %v1065 = vadd.f32 0.0, %v1064
        %1066 = vdwg.mxu0
        %v1067 = vadd.f32 %v1023, %v1063
        %v1068 = vadd.f32 %v1024, %v1065
        %s1069 = scalar_lea.vmem [#allocation7], 128
        %v1070 = vld [vmem:[%s1069] sm:$0xf]
        %v1071 = vld [vmem:[%s1069 + $0x4] sm:$0xf]
        %v1072 = vld [vmem:[%s1069 + $0x8] sm:$0xf]
        %v1073 = vld [vmem:[%s1069 + $0xc] sm:$0xf]
        %v1074 = vpack.c.b16 %v742, %v741
        %v1079 = vunpack.c.l.b16 %v1070
        %v1080 = vunpack.c.l.b16 %v1071
        %v1081 = vunpack.c.l.b16 %v1072
        %v1082 = vunpack.c.l.b16 %v1073
        %v1083 = vpack.c.b16 %v1080, %v1079
        %v1084 = vpack.c.b16 %v1082, %v1081
        %v1088 = vsel %vm377, %v1074, 0
        %1090 = vmatpush.bf16.msra.mxu0 0
        %1091 = vmatpush.bf16.msra.mxu0 0
        %1092 = vmatpush.bf16.msra.mxu0 0
        %1093 = vmatpush.bf16.msra.mxu0 0
        %1094 = vmatpush.bf16.msra.mxu0 0
        %1095 = vmatpush.bf16.msra.mxu0 0
        %1096 = vmatpush.bf16.msra.mxu0 %v1084
        %1097 = vmatpush.bf16.msra.mxu0 %v1083
        %1098 = vmatmul.bf16.gmra.mxu0 %v1088
        %v1099 = vpop.f32.mrf.mxu0
        %v1100 = vadd.f32 0.0, %v1099
        %v1101 = vpop.f32.mrf.mxu0
        %v1102 = vadd.f32 0.0, %v1101
        %1103 = vdwg.mxu0
        %v1104 = vadd.f32 %v1067, %v1100
        %v1105 = vadd.f32 %v1068, %v1102
        %v1106 = vperm.slane %v358, 4
        %v1107 = vadd.f32 %v1104, %v1106
        %v1108 = vadd.f32 %v1105, %v1106
        %v1109 = vmax.f32 %v1107, 0.0
        %v1110 = vmax.f32 %v1108, 0.0
        %v1111 = vpack.c.bf16 %v1110, %v1109
        %v1112 = vld [vmem:[%s6] sm:$0xf]
        %v1113 = vld [vmem:[%s6 + $0x4] sm:$0xf]
        %v1114 = vld [vmem:[%s6 + $0x8] sm:$0xf]
        %v1115 = vld [vmem:[%s6 + $0xc] sm:$0xf]
        %v1116 = vld [vmem:[%s6 + $0x10] sm:$0xf]
        %v1117 = vld [vmem:[%s6 + $0x14] sm:$0xf]
        %v1118 = vld [vmem:[%s6 + $0x18] sm:$0xf]
        %v1119 = vld [vmem:[%s6 + $0x1c] sm:$0xf]
        %v1120 = vperm.slane %v358, 5
        %v1129 = vunpack.c.l.b16 %v1112
        %v1130 = vunpack.c.l.b16 %v1113
        %v1131 = vunpack.c.l.b16 %v1114
        %v1132 = vunpack.c.l.b16 %v1115
        %v1133 = vunpack.c.l.b16 %v1116
        %v1134 = vunpack.c.l.b16 %v1117
        %v1135 = vunpack.c.l.b16 %v1118
        %v1136 = vunpack.c.l.b16 %v1119
        %v1137 = vpack.c.b16 %v1130, %v1129
        %v1138 = vpack.c.b16 %v1132, %v1131
        %v1139 = vpack.c.b16 %v1134, %v1133
        %v1140 = vpack.c.b16 %v1136, %v1135
        %vm1145 = vcmask 523264
        %v1147 = vsel %vm1145, %v1111, 0
        %1149 = vmatpush.bf16.msra.mxu0 0
        %1150 = vmatpush.bf16.msra.mxu0 0
        %1151 = vmatpush.bf16.msra.mxu0 0
        %1152 = vmatpush.bf16.msra.mxu0 0
        %1153 = vmatpush.bf16.msra.mxu0 %v1140
        %1154 = vmatpush.bf16.msra.mxu0 %v1139
        %1155 = vmatpush.bf16.msra.mxu0 %v1138
        %1156 = vmatpush.bf16.msra.mxu0 %v1137
        %1157 = vmatmul.bf16.gmra.mxu0 %v1147
        %v1158 = vpop.f32.mrf.mxu0
        %v1159 = vadd.f32 %v1120, %v1158
        %v1160 = vpop.f32.mrf.mxu0
        %v1161 = vadd.f32 %v1120, %v1160
        %1162 = vdwg.mxu0
        %v1163 = vadd.f32 %v1159, %v712
        %v1164 = vadd.f32 %v1161, %v713
        %v1165 = vsel %vm377, %v1163, 0.0
        %1166 = vadd.xlane.f32.xlu0 %v1165
        %v1167 = vpop.xlane.xlu0 %1166
        %v1168 = vsel %vm377, %v1164, 0.0
        %1169 = vadd.xlane.f32.xlu0 %v1168
        %v1170 = vpop.xlane.xlu0 %1169
        %v1171 = vmul.f32 %v1167, %v667
        %v1172 = vmul.f32 %v1170, %v667
        %v1173 = vsub.f32 %v1163, %v1171
        %v1174 = vsub.f32 %v1164, %v1172
        %v1175 = vmul.f32 %v1173, %v1173
        %v1176 = vmul.f32 %v1174, %v1174
        %v1177 = vsel %vm377, %v1175, 0.0
        %1178 = vadd.xlane.f32.xlu0 %v1177
        %v1179 = vpop.xlane.xlu0 %1178
        %v1180 = vsel %vm377, %v1176, 0.0
        %1181 = vadd.xlane.f32.xlu0 %v1180
        %v1182 = vpop.xlane.xlu0 %1181
        %v1183 = vmul.f32 %v1179, %v667
        %v1184 = vmul.f32 %v1182, %v667
        %v1185 = vadd.f32 %v1183, 1e-05
        %v1186 = vadd.f32 %v1184, 1e-05
        %v1187 = vrsqrt.pop %v1185
        %v1188 = vmul.f32 %v1187, %v1185
        %v1189 = vmul.f32 %v1188, %v1187
        %v1190 = vmul.f32 0.5, %v1189
        %v1191 = vsub.f32 1.5, %v1190
        %v1192 = vmul.f32 %v1187, %v1191
        %vm1193 = vweird.f32 %v1185
        %vm1194 = vweird.f32 %v1187
        %vm1195 = vmor %vm1193, %vm1194
        %v1196 = vsel %vm1195, %v1187, %v1192
        %v1197 = vrsqrt.pop %v1186
        %v1198 = vmul.f32 %v1197, %v1186
        %v1199 = vmul.f32 %v1198, %v1197
        %v1200 = vmul.f32 0.5, %v1199
        %v1201 = vsub.f32 1.5, %v1200
        %v1202 = vmul.f32 %v1197, %v1201
        %vm1203 = vweird.f32 %v1186
        %vm1204 = vweird.f32 %v1197
        %vm1205 = vmor %vm1203, %vm1204
        %v1206 = vsel %vm1205, %v1197, %v1202
        %v1207 = vmul.f32 %v1173, %v1196
        %v1208 = vmul.f32 %v1174, %v1206
        %v1209 = vperm.slane %v358, 6
        %v1210 = vmul.f32 %v1207, %v1209
        %v1211 = vmul.f32 %v1208, %v1209
        %v1212 = vperm.slane %v358, 7
        %v1213 = vadd.f32 %v1210, %v1212
        %v1214 = vadd.f32 %v1211, %v1212
        %v1215 = vmul.f32 %v1213, %v350
        %v1216 = vmul.f32 %v1214, %v351
        %s1217 = scalar_lea.vmem [#allocation9], 8
        %v1218 = vld [vmem:[%s1217] sm:$0xff]
        %v1219 = vpack.c.bf16 %v1216, %v1215
        %s1220 = scalar_lea.vmem %s3, 16
        %v1221 = vld [vmem:[%s1220] sm:$0xf]
        %v1222 = vld [vmem:[%s1220 + $0x4] sm:$0xf]
        %v1223 = vld [vmem:[%s1220 + $0x8] sm:$0xf]
        %v1224 = vld [vmem:[%s1220 + $0xc] sm:$0xf]
        %v1225 = vperm.slane %v1218, 0
        %v1230 = vunpack.c.l.b16 %v1221
        %v1231 = vunpack.c.l.b16 %v1222
        %v1232 = vunpack.c.l.b16 %v1223
        %v1233 = vunpack.c.l.b16 %v1224
        %v1234 = vpack.c.b16 %v1231, %v1230
        %v1235 = vpack.c.b16 %v1233, %v1232
        %v1239 = vsel %vm377, %v1219, 0
        %1241 = vmatpush.bf16.msra.mxu0 0
        %1242 = vmatpush.bf16.msra.mxu0 0
        %1243 = vmatpush.bf16.msra.mxu0 0
        %1244 = vmatpush.bf16.msra.mxu0 0
        %1245 = vmatpush.bf16.msra.mxu0 0
        %1246 = vmatpush.bf16.msra.mxu0 0
        %1247 = vmatpush.bf16.msra.mxu0 %v1235
        %1248 = vmatpush.bf16.msra.mxu0 %v1234
        %1249 = vmatmul.bf16.gmra.mxu0 %v1239
        %v1250 = vpop.f32.mrf.mxu0
        %v1251 = vadd.f32 %v1225, %v1250
        %v1252 = vpop.f32.mrf.mxu0
        %v1253 = vadd.f32 %v1225, %v1252
        %1254 = vdwg.mxu0
        %v1255 = vpack.c.bf16 %v1253, %v1251
        %1258 = vrot.lane.b32.xlu0 %v1251, 96
        %v1259 = vpop.permute.xlu0 %1258
        %1260 = vrot.lane.b32.xlu0 %v1253, 96
        %v1261 = vpop.permute.xlu0 %1260
        %1264 = vxpose.xlu0.b32.start [1/16] %v1259, 128
        %1265 = vxpose.xlu0.b32.cont [2/16] %v1261, 128
        %1266 = vxpose.xlu0.b32.cont [3/16] 0.0, 128
        %1267 = vxpose.xlu0.b32.cont [4/16] 0.0, 128
        %1268 = vxpose.xlu0.b32.cont [5/16] 0.0, 128
        %1269 = vxpose.xlu0.b32.cont [6/16] 0.0, 128
        %1270 = vxpose.xlu0.b32.cont [7/16] 0.0, 128
        %1271 = vxpose.xlu0.b32.cont [8/16] 0.0, 128
        %1272 = vxpose.xlu0.b32.cont [9/16] 0.0, 128
        %1273 = vxpose.xlu0.b32.cont [10/16] 0.0, 128
        %1274 = vxpose.xlu0.b32.cont [11/16] 0.0, 128
        %1275 = vxpose.xlu0.b32.cont [12/16] 0.0, 128
        %1276 = vxpose.xlu0.b32.cont [13/16] 0.0, 128
        %1277 = vxpose.xlu0.b32.cont [14/16] 0.0, 128
        %1278 = vxpose.xlu0.b32.cont [15/16] 0.0, 128
        %1279 = vxpose.xlu0.b32.end [16/16] 0.0, 128
        %v1280 = vpop.trf.xlu0
        %v1281 = vpop.trf.xlu0
        %v1282 = vpop.trf.xlu0
        %v1283 = vpop.trf.xlu0
        %v1284 = vpop.trf.xlu0
        %v1285 = vpop.trf.xlu0
        %v1286 = vpop.trf.xlu0
        %v1287 = vpop.trf.xlu0
        %v1288 = vpop.trf.xlu0
        %v1289 = vpop.trf.xlu0
        %v1290 = vpop.trf.xlu0
        %v1291 = vpop.trf.xlu0
        %v1292 = vpop.trf.xlu0
        %v1293 = vpop.trf.xlu0
        %v1294 = vpop.trf.xlu0
        %v1295 = vpop.trf.xlu0
        %v1296 = vpack.c.bf16 %v1281, %v1280
        %v1298 = vsel %vm437, %v1255, 0
        %1300 = vmatpush.bf16.msra.mxu0 0
        %1301 = vmatpush.bf16.msra.mxu0 0
        %1302 = vmatpush.bf16.msra.mxu0 0
        %1303 = vmatpush.bf16.msra.mxu0 0
        %1304 = vmatpush.bf16.msra.mxu0 0
        %1305 = vmatpush.bf16.msra.mxu0 0
        %1306 = vmatpush.bf16.msra.mxu0 0
        %1307 = vmatpush.bf16.msra.mxu0 %v1296
        %1308 = vmatmul.bf16.gmra.mxu0 %v1298
        %v1309 = vpop.f32.mrf.mxu0
        %v1310 = vadd.f32 0.0, %v1309
        %v1311 = vpop.f32.mrf.mxu0
        %v1312 = vadd.f32 0.0, %v1311
        %1313 = vdwg.mxu0
        %v1314 = vmul.f32 %v1310, 0.25
        %v1315 = vmul.f32 %v1312, 0.25
        %v1316 = vadd.f32 %v1314, %v342
        %v1317 = vadd.f32 %v1315, %v342
        %v1318 = vsel %vm437, %v1316, -inf
        %1319 = vmax.xlane.f32.xlu0 %v1318
        %v1320 = vpop.xlane.xlu0 %1319
        %v1321 = vsel %vm437, %v1317, -inf
        %1322 = vmax.xlane.f32.xlu0 %v1321
        %v1323 = vpop.xlane.xlu0 %1322
        %v1324 = vsub.f32 %v1316, %v1320
        %v1325 = vsub.f32 %v1317, %v1323
        %v1326 = vmul.f32 %v1324, 1.442695
        %v1327 = vpow.pop %v1326
        %v1328 = vmul.f32 %v1325, 1.442695
        %v1329 = vpow.pop %v1328
        %v1330 = vsel %vm437, %v1327, 0.0
        %1331 = vadd.xlane.f32.xlu0 %v1330
        %v1332 = vpop.xlane.xlu0 %1331
        %v1333 = vsel %vm437, %v1329, 0.0
        %1334 = vadd.xlane.f32.xlu0 %v1333
        %v1335 = vpop.xlane.xlu0 %1334
        %v1336 = vrcp.pop %v1332
        %v1337 = vrcp.pop %v1335
        %v1338 = vmul.f32 %v1327, %v1336
        %v1339 = vmul.f32 %v1329, %v1337
        %v1340 = vpack.c.bf16 %v1339, %v1338
        %1342 = vrot.lane.b32.xlu0 %v1255, 64
        %v1343 = vpop.permute.xlu0 %1342
        %v1346 = vsel %vm437, %v1340, 0
        %1348 = vmatpush.bf16.msra.mxu0 0
        %1349 = vmatpush.bf16.msra.mxu0 0
        %1350 = vmatpush.bf16.msra.mxu0 0
        %1351 = vmatpush.bf16.msra.mxu0 0
        %1352 = vmatpush.bf16.msra.mxu0 0
        %1353 = vmatpush.bf16.msra.mxu0 0
        %1354 = vmatpush.bf16.msra.mxu0 0
        %1355 = vmatpush.bf16.msra.mxu0 %v1343
        %1356 = vmatmul.bf16.gmra.mxu0 %v1346
        %v1357 = vpop.f32.mrf.mxu0
        %v1358 = vadd.f32 0.0, %v1357
        %v1359 = vpop.f32.mrf.mxu0
        %v1360 = vadd.f32 0.0, %v1359
        %1361 = vdwg.mxu0
        %1362 = vrot.lane.b32.xlu0 %v1251, 80
        %v1363 = vpop.permute.xlu0 %1362
        %1364 = vrot.lane.b32.xlu0 %v1253, 80
        %v1365 = vpop.permute.xlu0 %1364
        %1368 = vxpose.xlu0.b32.start [1/16] %v1363, 128
        %1369 = vxpose.xlu0.b32.cont [2/16] %v1365, 128
        %1370 = vxpose.xlu0.b32.cont [3/16] 0.0, 128
        %1371 = vxpose.xlu0.b32.cont [4/16] 0.0, 128
        %1372 = vxpose.xlu0.b32.cont [5/16] 0.0, 128
        %1373 = vxpose.xlu0.b32.cont [6/16] 0.0, 128
        %1374 = vxpose.xlu0.b32.cont [7/16] 0.0, 128
        %1375 = vxpose.xlu0.b32.cont [8/16] 0.0, 128
        %1376 = vxpose.xlu0.b32.cont [9/16] 0.0, 128
        %1377 = vxpose.xlu0.b32.cont [10/16] 0.0, 128
        %1378 = vxpose.xlu0.b32.cont [11/16] 0.0, 128
        %1379 = vxpose.xlu0.b32.cont [12/16] 0.0, 128
        %1380 = vxpose.xlu0.b32.cont [13/16] 0.0, 128
        %1381 = vxpose.xlu0.b32.cont [14/16] 0.0, 128
        %1382 = vxpose.xlu0.b32.cont [15/16] 0.0, 128
        %1383 = vxpose.xlu0.b32.end [16/16] 0.0, 128
        %v1384 = vpop.trf.xlu0
        %v1385 = vpop.trf.xlu0
        %v1386 = vpop.trf.xlu0
        %v1387 = vpop.trf.xlu0
        %v1388 = vpop.trf.xlu0
        %v1389 = vpop.trf.xlu0
        %v1390 = vpop.trf.xlu0
        %v1391 = vpop.trf.xlu0
        %v1392 = vpop.trf.xlu0
        %v1393 = vpop.trf.xlu0
        %v1394 = vpop.trf.xlu0
        %v1395 = vpop.trf.xlu0
        %v1396 = vpop.trf.xlu0
        %v1397 = vpop.trf.xlu0
        %v1398 = vpop.trf.xlu0
        %v1399 = vpop.trf.xlu0
        %v1400 = vpack.c.bf16 %v1385, %v1384
        %1401 = vrot.lane.b32.xlu0 %v1255, 112
        %v1402 = vpop.permute.xlu0 %1401
        %v1404 = vsel %vm437, %v1402, 0
        %1406 = vmatpush.bf16.msra.mxu0 0
        %1407 = vmatpush.bf16.msra.mxu0 0
        %1408 = vmatpush.bf16.msra.mxu0 0
        %1409 = vmatpush.bf16.msra.mxu0 0
        %1410 = vmatpush.bf16.msra.mxu0 0
        %1411 = vmatpush.bf16.msra.mxu0 0
        %1412 = vmatpush.bf16.msra.mxu0 0
        %1413 = vmatpush.bf16.msra.mxu0 %v1400
        %1414 = vmatmul.bf16.gmra.mxu0 %v1404
        %v1415 = vpop.f32.mrf.mxu0
        %v1416 = vadd.f32 0.0, %v1415
        %v1417 = vpop.f32.mrf.mxu0
        %v1418 = vadd.f32 0.0, %v1417
        %1419 = vdwg.mxu0
        %v1420 = vmul.f32 %v1416, 0.25
        %v1421 = vmul.f32 %v1418, 0.25
        %v1422 = vadd.f32 %v1420, %v342
        %v1423 = vadd.f32 %v1421, %v342
        %v1424 = vsel %vm437, %v1422, -inf
        %1425 = vmax.xlane.f32.xlu0 %v1424
        %v1426 = vpop.xlane.xlu0 %1425
        %v1427 = vsel %vm437, %v1423, -inf
        %1428 = vmax.xlane.f32.xlu0 %v1427
        %v1429 = vpop.xlane.xlu0 %1428
        %v1430 = vsub.f32 %v1422, %v1426
        %v1431 = vsub.f32 %v1423, %v1429
        %v1432 = vmul.f32 %v1430, 1.442695
        %v1433 = vpow.pop %v1432
        %v1434 = vmul.f32 %v1431, 1.442695
        %v1435 = vpow.pop %v1434
        %v1436 = vsel %vm437, %v1433, 0.0
        %1437 = vadd.xlane.f32.xlu0 %v1436
        %v1438 = vpop.xlane.xlu0 %1437
        %v1439 = vsel %vm437, %v1435, 0.0
        %1440 = vadd.xlane.f32.xlu0 %v1439
        %v1441 = vpop.xlane.xlu0 %1440
        %v1442 = vrcp.pop %v1438
        %v1443 = vrcp.pop %v1441
        %v1444 = vmul.f32 %v1433, %v1442
        %v1445 = vmul.f32 %v1435, %v1443
        %v1446 = vpack.c.bf16 %v1445, %v1444
        %1447 = vrot.lane.b32.xlu0 %v1255, 48
        %v1448 = vpop.permute.xlu0 %1447
        %v1451 = vsel %vm437, %v1446, 0
        %1453 = vmatpush.bf16.msra.mxu0 0
        %1454 = vmatpush.bf16.msra.mxu0 0
        %1455 = vmatpush.bf16.msra.mxu0 0
        %1456 = vmatpush.bf16.msra.mxu0 0
        %1457 = vmatpush.bf16.msra.mxu0 0
        %1458 = vmatpush.bf16.msra.mxu0 0
        %1459 = vmatpush.bf16.msra.mxu0 0
        %1460 = vmatpush.bf16.msra.mxu0 %v1448
        %1461 = vmatmul.bf16.gmra.mxu0 %v1451
        %v1462 = vpop.f32.mrf.mxu0
        %v1463 = vadd.f32 0.0, %v1462
        %v1464 = vpop.f32.mrf.mxu0
        %v1465 = vadd.f32 0.0, %v1464
        %1466 = vdwg.mxu0
        %1469 = vrot.lane.b32.xlu0 %v1463, 16
        %v1470 = vpop.permute.xlu0 %1469
        %1471 = vrot.lane.b32.xlu0 %v1465, 16
        %v1472 = vpop.permute.xlu0 %1471
        %v1475 = vsel %vm437, %v1358, %v1470
        %v1476 = vsel %vm437, %v1360, %v1472
        %v1477 = vpack.c.bf16 %v1476, %v1475
        %s1478 = scalar_lea.vmem %s4, 16
        %v1479 = vld [vmem:[%s1478] sm:$0xf]
        %v1480 = vld [vmem:[%s1478 + $0x4] sm:$0xf]
        %v1481 = vld [vmem:[%s1478 + $0x8] sm:$0xf]
        %v1482 = vld [vmem:[%s1478 + $0xc] sm:$0xf]
        %v1483 = vperm.slane %v1218, 1
        %v1488 = vunpack.c.l.b16 %v1479
        %v1489 = vunpack.c.l.b16 %v1480
        %v1490 = vunpack.c.l.b16 %v1481
        %v1491 = vunpack.c.l.b16 %v1482
        %v1492 = vpack.c.b16 %v1489, %v1488
        %v1493 = vpack.c.b16 %v1491, %v1490
        %v1497 = vsel %vm377, %v1477, 0
        %1499 = vmatpush.bf16.msra.mxu0 0
        %1500 = vmatpush.bf16.msra.mxu0 0
        %1501 = vmatpush.bf16.msra.mxu0 0
        %1502 = vmatpush.bf16.msra.mxu0 0
        %1503 = vmatpush.bf16.msra.mxu0 0
        %1504 = vmatpush.bf16.msra.mxu0 0
        %1505 = vmatpush.bf16.msra.mxu0 %v1493
        %1506 = vmatpush.bf16.msra.mxu0 %v1492
        %1507 = vmatmul.bf16.gmra.mxu0 %v1497
        %v1508 = vpop.f32.mrf.mxu0
        %v1509 = vadd.f32 %v1483, %v1508
        %v1510 = vpop.f32.mrf.mxu0
        %v1511 = vadd.f32 %v1483, %v1510
        %1512 = vdwg.mxu0
        %v1513 = vadd.f32 %v1509, %v1215
        %v1514 = vadd.f32 %v1511, %v1216
        %v1515 = vsel %vm377, %v1513, 0.0
        %1516 = vadd.xlane.f32.xlu0 %v1515
        %v1517 = vpop.xlane.xlu0 %1516
        %v1518 = vsel %vm377, %v1514, 0.0
        %1519 = vadd.xlane.f32.xlu0 %v1518
        %v1520 = vpop.xlane.xlu0 %1519
        %v1521 = vmul.f32 %v1517, %v667
        %v1522 = vmul.f32 %v1520, %v667
        %v1523 = vsub.f32 %v1513, %v1521
        %v1524 = vsub.f32 %v1514, %v1522
        %v1525 = vmul.f32 %v1523, %v1523
        %v1526 = vmul.f32 %v1524, %v1524
        %v1527 = vsel %vm377, %v1525, 0.0
        %1528 = vadd.xlane.f32.xlu0 %v1527
        %v1529 = vpop.xlane.xlu0 %1528
        %v1530 = vsel %vm377, %v1526, 0.0
        %1531 = vadd.xlane.f32.xlu0 %v1530
        %v1532 = vpop.xlane.xlu0 %1531
        %v1533 = vmul.f32 %v1529, %v667
        %v1534 = vmul.f32 %v1532, %v667
        %v1535 = vadd.f32 %v1533, 1e-05
        %v1536 = vadd.f32 %v1534, 1e-05
        %v1537 = vrsqrt.pop %v1535
        %v1538 = vmul.f32 %v1537, %v1535
        %v1539 = vmul.f32 %v1538, %v1537
        %v1540 = vmul.f32 0.5, %v1539
        %v1541 = vsub.f32 1.5, %v1540
        %v1542 = vmul.f32 %v1537, %v1541
        %vm1543 = vweird.f32 %v1535
        %vm1544 = vweird.f32 %v1537
        %vm1545 = vmor %vm1543, %vm1544
        %v1546 = vsel %vm1545, %v1537, %v1542
        %v1547 = vrsqrt.pop %v1536
        %v1548 = vmul.f32 %v1547, %v1536
        %v1549 = vmul.f32 %v1548, %v1547
        %v1550 = vmul.f32 0.5, %v1549
        %v1551 = vsub.f32 1.5, %v1550
        %v1552 = vmul.f32 %v1547, %v1551
        %vm1553 = vweird.f32 %v1536
        %vm1554 = vweird.f32 %v1547
        %vm1555 = vmor %vm1553, %vm1554
        %v1556 = vsel %vm1555, %v1547, %v1552
        %v1557 = vmul.f32 %v1523, %v1546
        %v1558 = vmul.f32 %v1524, %v1556
        %v1559 = vperm.slane %v1218, 2
        %v1560 = vmul.f32 %v1557, %v1559
        %v1561 = vmul.f32 %v1558, %v1559
        %v1562 = vperm.slane %v1218, 3
        %v1563 = vadd.f32 %v1560, %v1562
        %v1564 = vadd.f32 %v1561, %v1562
        %v1565 = vmul.f32 %v1563, %v350
        %v1566 = vmul.f32 %v1564, %v351
        %v1569 = vrot.slane %v1565, 4
        %v1570 = vrot.slane %v1566, 4
        %v1571 = vsel %vm716, %v1569, %v1570
        %v1575 = vsel %vm716, 0.0, %v1569
        %v1576 = vsel %vm716, %v1570, 0.0
        %v1577 = vpack.c.bf16 %v1575, %v1575
        %v1578 = vpack.c.bf16 %v1571, %v1571
        %v1579 = vpack.c.bf16 %v1576, %v1576
        %s1580 = scalar_lea.vmem [#allocation7], 144
        %v1581 = vld [vmem:[%s1580] sm:$0xf]
        %v1582 = vld [vmem:[%s1580 + $0x4] sm:$0xf]
        %v1583 = vld [vmem:[%s1580 + $0x8] sm:$0xf]
        %v1584 = vld [vmem:[%s1580 + $0xc] sm:$0xf]
        %s1585 = scalar_lea.vmem [#allocation7], 160
        %v1586 = vld [vmem:[%s1585] sm:$0xf]
        %v1587 = vld [vmem:[%s1585 + $0x4] sm:$0xf]
        %v1588 = vld [vmem:[%s1585 + $0x8] sm:$0xf]
        %v1589 = vld [vmem:[%s1585 + $0xc] sm:$0xf]
        %v1593 = vunpack.c.l.b16 %v1577
        %v1594 = vunpack.c.l.b16 %v1578
        %v1595 = vunpack.c.l.b16 %v1579
        %v1596 = vpack.c.b16 %v1594, %v1593
        %v1597 = vpack.c.b16 %v1595, %v1595
        %v1599 = vshrl.u32 %v1596, 16
        %v1601 = vshll.u32 %v1596, 16
        %v1603 = vrot.slane %v1601, 1
        %v1604 = vor.u32 %v1599, %v1603
        %v1606 = vshll.u32 %v1597, 16
        %v1608 = vrot.slane %v1606, 1
        %v1609 = vsel %vm745, %v1604, %v1608
        %v1614 = vunpack.c.l.b16 %v1586
        %v1615 = vunpack.c.l.b16 %v1587
        %v1616 = vunpack.c.l.b16 %v1588
        %v1617 = vunpack.c.l.b16 %v1589
        %v1618 = vpack.c.b16 %v1615, %v1614
        %v1619 = vpack.c.b16 %v1617, %v1616
        %v1623 = vsel %vm377, %v1609, 0
        %1625 = vmatpush.bf16.msra.mxu0 0
        %1626 = vmatpush.bf16.msra.mxu0 0
        %1627 = vmatpush.bf16.msra.mxu0 0
        %1628 = vmatpush.bf16.msra.mxu0 0
        %1629 = vmatpush.bf16.msra.mxu0 0
        %1630 = vmatpush.bf16.msra.mxu0 0
        %1631 = vmatpush.bf16.msra.mxu0 %v1619
        %1632 = vmatpush.bf16.msra.mxu0 %v1618
        %1633 = vmatmul.bf16.gmra.mxu0 %v1623
        %v1634 = vpop.f32.mrf.mxu0
        %v1635 = vadd.f32 0.0, %v1634
        %v1636 = vpop.f32.mrf.mxu0
        %v1637 = vadd.f32 0.0, %v1636
        %1638 = vdwg.mxu0
        %v1643 = vunpack.c.l.b16 %v1581
        %v1644 = vunpack.c.l.b16 %v1582
        %v1645 = vunpack.c.l.b16 %v1583
        %v1646 = vunpack.c.l.b16 %v1584
        %v1647 = vpack.c.b16 %v1644, %v1643
        %v1648 = vpack.c.b16 %v1646, %v1645
        %v1651 = vsel %vm377, %v1596, 0
        %1653 = vmatpush.bf16.msra.mxu0 0
        %1654 = vmatpush.bf16.msra.mxu0 0
        %1655 = vmatpush.bf16.msra.mxu0 0
        %1656 = vmatpush.bf16.msra.mxu0 0
        %1657 = vmatpush.bf16.msra.mxu0 0
        %1658 = vmatpush.bf16.msra.mxu0 0
        %1659 = vmatpush.bf16.msra.mxu0 %v1648
        %1660 = vmatpush.bf16.msra.mxu0 %v1647
        %1661 = vmatmul.bf16.gmra.mxu0 %v1651
        %v1662 = vpop.f32.mrf.mxu0
        %v1663 = vadd.f32 %v1635, %v1662
        %v1664 = vpop.f32.mrf.mxu0
        %v1665 = vadd.f32 %v1637, %v1664
        %1666 = vdwg.mxu0
        %s1667 = scalar_lea.vmem [#allocation7], 176
        %v1668 = vld [vmem:[%s1667] sm:$0xf]
        %v1669 = vld [vmem:[%s1667 + $0x4] sm:$0xf]
        %v1670 = vld [vmem:[%s1667 + $0x8] sm:$0xf]
        %v1671 = vld [vmem:[%s1667 + $0xc] sm:$0xf]
        %v1672 = vrot.slane %v1596, 1
        %v1673 = vrot.slane %v1597, 1
        %v1674 = vsel %vm820, %v1672, %v1673
        %v1679 = vunpack.c.l.b16 %v1668
        %v1680 = vunpack.c.l.b16 %v1669
        %v1681 = vunpack.c.l.b16 %v1670
        %v1682 = vunpack.c.l.b16 %v1671
        %v1683 = vpack.c.b16 %v1680, %v1679
        %v1684 = vpack.c.b16 %v1682, %v1681
        %v1688 = vsel %vm377, %v1674, 0
        %1690 = vmatpush.bf16.msra.mxu0 0
        %1691 = vmatpush.bf16.msra.mxu0 0
        %1692 = vmatpush.bf16.msra.mxu0 0
        %1693 = vmatpush.bf16.msra.mxu0 0
        %1694 = vmatpush.bf16.msra.mxu0 0
        %1695 = vmatpush.bf16.msra.mxu0 0
        %1696 = vmatpush.bf16.msra.mxu0 %v1684
        %1697 = vmatpush.bf16.msra.mxu0 %v1683
        %1698 = vmatmul.bf16.gmra.mxu0 %v1688
        %v1699 = vpop.f32.mrf.mxu0
        %v1700 = vadd.f32 0.0, %v1699
        %v1701 = vpop.f32.mrf.mxu0
        %v1702 = vadd.f32 0.0, %v1701
        %1703 = vdwg.mxu0
        %v1704 = vadd.f32 %v1663, %v1700
        %v1705 = vadd.f32 %v1665, %v1702
        %s1706 = scalar_lea.vmem [#allocation7], 192
        %v1707 = vld [vmem:[%s1706] sm:$0xf]
        %v1708 = vld [vmem:[%s1706 + $0x4] sm:$0xf]
        %v1709 = vld [vmem:[%s1706 + $0x8] sm:$0xf]
        %v1710 = vld [vmem:[%s1706 + $0xc] sm:$0xf]
        %v1711 = vrot.slane %v1599, 1
        %v1712 = vrot.slane %v1601, 2
        %v1713 = vor.u32 %v1711, %v1712
        %v1714 = vshrl.u32 %v1597, 16
        %v1716 = vrot.slane %v1714, 1
        %v1717 = vrot.slane %v1606, 2
        %v1718 = vor.u32 %v1716, %v1717
        %v1719 = vsel %vm860, %v1713, %v1718
        %v1724 = vunpack.c.l.b16 %v1707
        %v1725 = vunpack.c.l.b16 %v1708
        %v1726 = vunpack.c.l.b16 %v1709
        %v1727 = vunpack.c.l.b16 %v1710
        %v1728 = vpack.c.b16 %v1725, %v1724
        %v1729 = vpack.c.b16 %v1727, %v1726
        %v1733 = vsel %vm377, %v1719, 0
        %1735 = vmatpush.bf16.msra.mxu0 0
        %1736 = vmatpush.bf16.msra.mxu0 0
        %1737 = vmatpush.bf16.msra.mxu0 0
        %1738 = vmatpush.bf16.msra.mxu0 0
        %1739 = vmatpush.bf16.msra.mxu0 0
        %1740 = vmatpush.bf16.msra.mxu0 0
        %1741 = vmatpush.bf16.msra.mxu0 %v1729
        %1742 = vmatpush.bf16.msra.mxu0 %v1728
        %1743 = vmatmul.bf16.gmra.mxu0 %v1733
        %v1744 = vpop.f32.mrf.mxu0
        %v1745 = vadd.f32 0.0, %v1744
        %v1746 = vpop.f32.mrf.mxu0
        %v1747 = vadd.f32 0.0, %v1746
        %1748 = vdwg.mxu0
        %v1749 = vadd.f32 %v1704, %v1745
        %v1750 = vadd.f32 %v1705, %v1747
        %s1751 = scalar_lea.vmem [#allocation7], 208
        %v1752 = vld [vmem:[%s1751] sm:$0xf]
        %v1753 = vld [vmem:[%s1751 + $0x4] sm:$0xf]
        %v1754 = vld [vmem:[%s1751 + $0x8] sm:$0xf]
        %v1755 = vld [vmem:[%s1751 + $0xc] sm:$0xf]
        %v1756 = vrot.slane %v1596, 2
        %v1757 = vrot.slane %v1597, 2
        %v1758 = vsel %vm906, %v1756, %v1757
        %v1763 = vunpack.c.l.b16 %v1752
        %v1764 = vunpack.c.l.b16 %v1753
        %v1765 = vunpack.c.l.b16 %v1754
        %v1766 = vunpack.c.l.b16 %v1755
        %v1767 = vpack.c.b16 %v1764, %v1763
        %v1768 = vpack.c.b16 %v1766, %v1765
        %v1772 = vsel %vm377, %v1758, 0
        %1774 = vmatpush.bf16.msra.mxu0 0
        %1775 = vmatpush.bf16.msra.mxu0 0
        %1776 = vmatpush.bf16.msra.mxu0 0
        %1777 = vmatpush.bf16.msra.mxu0 0
        %1778 = vmatpush.bf16.msra.mxu0 0
        %1779 = vmatpush.bf16.msra.mxu0 0
        %1780 = vmatpush.bf16.msra.mxu0 %v1768
        %1781 = vmatpush.bf16.msra.mxu0 %v1767
        %1782 = vmatmul.bf16.gmra.mxu0 %v1772
        %v1783 = vpop.f32.mrf.mxu0
        %v1784 = vadd.f32 0.0, %v1783
        %v1785 = vpop.f32.mrf.mxu0
        %v1786 = vadd.f32 0.0, %v1785
        %1787 = vdwg.mxu0
        %v1788 = vadd.f32 %v1749, %v1784
        %v1789 = vadd.f32 %v1750, %v1786
        %s1790 = scalar_lea.vmem [#allocation7], 224
        %v1791 = vld [vmem:[%s1790] sm:$0xf]
        %v1792 = vld [vmem:[%s1790 + $0x4] sm:$0xf]
        %v1793 = vld [vmem:[%s1790 + $0x8] sm:$0xf]
        %v1794 = vld [vmem:[%s1790 + $0xc] sm:$0xf]
        %v1795 = vrot.slane %v1599, 2
        %v1796 = vrot.slane %v1601, 3
        %v1797 = vor.u32 %v1795, %v1796
        %v1798 = vrot.slane %v1714, 2
        %v1799 = vrot.slane %v1606, 3
        %v1800 = vor.u32 %v1798, %v1799
        %v1801 = vsel %vm946, %v1797, %v1800
        %v1806 = vunpack.c.l.b16 %v1791
        %v1807 = vunpack.c.l.b16 %v1792
        %v1808 = vunpack.c.l.b16 %v1793
        %v1809 = vunpack.c.l.b16 %v1794
        %v1810 = vpack.c.b16 %v1807, %v1806
        %v1811 = vpack.c.b16 %v1809, %v1808
        %v1815 = vsel %vm377, %v1801, 0
        %1817 = vmatpush.bf16.msra.mxu0 0
        %1818 = vmatpush.bf16.msra.mxu0 0
        %1819 = vmatpush.bf16.msra.mxu0 0
        %1820 = vmatpush.bf16.msra.mxu0 0
        %1821 = vmatpush.bf16.msra.mxu0 0
        %1822 = vmatpush.bf16.msra.mxu0 0
        %1823 = vmatpush.bf16.msra.mxu0 %v1811
        %1824 = vmatpush.bf16.msra.mxu0 %v1810
        %1825 = vmatmul.bf16.gmra.mxu0 %v1815
        %v1826 = vpop.f32.mrf.mxu0
        %v1827 = vadd.f32 0.0, %v1826
        %v1828 = vpop.f32.mrf.mxu0
        %v1829 = vadd.f32 0.0, %v1828
        %1830 = vdwg.mxu0
        %v1831 = vadd.f32 %v1788, %v1827
        %v1832 = vadd.f32 %v1789, %v1829
        %s1833 = scalar_lea.vmem [#allocation7], 240
        %v1834 = vld [vmem:[%s1833] sm:$0xf]
        %v1835 = vld [vmem:[%s1833 + $0x4] sm:$0xf]
        %v1836 = vld [vmem:[%s1833 + $0x8] sm:$0xf]
        %v1837 = vld [vmem:[%s1833 + $0xc] sm:$0xf]
        %v1838 = vrot.slane %v1596, 3
        %v1839 = vrot.slane %v1597, 3
        %v1840 = vsel %vm990, %v1838, %v1839
        %v1845 = vunpack.c.l.b16 %v1834
        %v1846 = vunpack.c.l.b16 %v1835
        %v1847 = vunpack.c.l.b16 %v1836
        %v1848 = vunpack.c.l.b16 %v1837
        %v1849 = vpack.c.b16 %v1846, %v1845
        %v1850 = vpack.c.b16 %v1848, %v1847
        %v1854 = vsel %vm377, %v1840, 0
        %1856 = vmatpush.bf16.msra.mxu0 0
        %1857 = vmatpush.bf16.msra.mxu0 0
        %1858 = vmatpush.bf16.msra.mxu0 0
        %1859 = vmatpush.bf16.msra.mxu0 0
        %1860 = vmatpush.bf16.msra.mxu0 0
        %1861 = vmatpush.bf16.msra.mxu0 0
        %1862 = vmatpush.bf16.msra.mxu0 %v1850
        %1863 = vmatpush.bf16.msra.mxu0 %v1849
        %1864 = vmatmul.bf16.gmra.mxu0 %v1854
        %v1865 = vpop.f32.mrf.mxu0
        %v1866 = vadd.f32 0.0, %v1865
        %v1867 = vpop.f32.mrf.mxu0
        %v1868 = vadd.f32 0.0, %v1867
        %1869 = vdwg.mxu0
        %v1870 = vadd.f32 %v1831, %v1866
        %v1871 = vadd.f32 %v1832, %v1868
        %s1872 = scalar_lea.vmem [#allocation7], 256
        %v1873 = vld [vmem:[%s1872] sm:$0xf]
        %v1874 = vld [vmem:[%s1872 + $0x4] sm:$0xf]
        %v1875 = vld [vmem:[%s1872 + $0x8] sm:$0xf]
        %v1876 = vld [vmem:[%s1872 + $0xc] sm:$0xf]
        %v1877 = vrot.slane %v1599, 3
        %v1878 = vrot.slane %v1601, 4
        %v1879 = vor.u32 %v1877, %v1878
        %v1880 = vrot.slane %v1714, 3
        %v1881 = vrot.slane %v1606, 4
        %v1882 = vor.u32 %v1880, %v1881
        %v1883 = vsel %vm1030, %v1879, %v1882
        %v1888 = vunpack.c.l.b16 %v1873
        %v1889 = vunpack.c.l.b16 %v1874
        %v1890 = vunpack.c.l.b16 %v1875
        %v1891 = vunpack.c.l.b16 %v1876
        %v1892 = vpack.c.b16 %v1889, %v1888
        %v1893 = vpack.c.b16 %v1891, %v1890
        %v1897 = vsel %vm377, %v1883, 0
        %1899 = vmatpush.bf16.msra.mxu0 0
        %1900 = vmatpush.bf16.msra.mxu0 0
        %1901 = vmatpush.bf16.msra.mxu0 0
        %1902 = vmatpush.bf16.msra.mxu0 0
        %1903 = vmatpush.bf16.msra.mxu0 0
        %1904 = vmatpush.bf16.msra.mxu0 0
        %1905 = vmatpush.bf16.msra.mxu0 %v1893
        %1906 = vmatpush.bf16.msra.mxu0 %v1892
        %1907 = vmatmul.bf16.gmra.mxu0 %v1897
        %v1908 = vpop.f32.mrf.mxu0
        %v1909 = vadd.f32 0.0, %v1908
        %v1910 = vpop.f32.mrf.mxu0
        %v1911 = vadd.f32 0.0, %v1910
        %1912 = vdwg.mxu0
        %v1913 = vadd.f32 %v1870, %v1909
        %v1914 = vadd.f32 %v1871, %v1911
        %s1915 = scalar_lea.vmem [#allocation7], 272
        %v1916 = vld [vmem:[%s1915] sm:$0xf]
        %v1917 = vld [vmem:[%s1915 + $0x4] sm:$0xf]
        %v1918 = vld [vmem:[%s1915 + $0x8] sm:$0xf]
        %v1919 = vld [vmem:[%s1915 + $0xc] sm:$0xf]
        %v1920 = vpack.c.b16 %v1595, %v1594
        %v1925 = vunpack.c.l.b16 %v1916
        %v1926 = vunpack.c.l.b16 %v1917
        %v1927 = vunpack.c.l.b16 %v1918
        %v1928 = vunpack.c.l.b16 %v1919
        %v1929 = vpack.c.b16 %v1926, %v1925
        %v1930 = vpack.c.b16 %v1928, %v1927
        %v1934 = vsel %vm377, %v1920, 0
        %1936 = vmatpush.bf16.msra.mxu0 0
        %1937 = vmatpush.bf16.msra.mxu0 0
        %1938 = vmatpush.bf16.msra.mxu0 0
        %1939 = vmatpush.bf16.msra.mxu0 0
        %1940 = vmatpush.bf16.msra.mxu0 0
        %1941 = vmatpush.bf16.msra.mxu0 0
        %1942 = vmatpush.bf16.msra.mxu0 %v1930
        %1943 = vmatpush.bf16.msra.mxu0 %v1929
        %1944 = vmatmul.bf16.gmra.mxu0 %v1934
        %v1945 = vpop.f32.mrf.mxu0
        %v1946 = vadd.f32 0.0, %v1945
        %v1947 = vpop.f32.mrf.mxu0
        %v1948 = vadd.f32 0.0, %v1947
        %1949 = vdwg.mxu0
        %v1950 = vadd.f32 %v1913, %v1946
        %v1951 = vadd.f32 %v1914, %v1948
        %v1952 = vperm.slane %v1218, 4
        %v1953 = vadd.f32 %v1950, %v1952
        %v1954 = vadd.f32 %v1951, %v1952
        %v1955 = vmax.f32 %v1953, 0.0
        %v1956 = vmax.f32 %v1954, 0.0
        %v1957 = vpack.c.bf16 %v1956, %v1955
        %s1958 = scalar_lea.vmem %s6, 32
        %v1959 = vld [vmem:[%s1958] sm:$0xf]
        %v1960 = vld [vmem:[%s1958 + $0x4] sm:$0xf]
        %v1961 = vld [vmem:[%s1958 + $0x8] sm:$0xf]
        %v1962 = vld [vmem:[%s1958 + $0xc] sm:$0xf]
        %v1963 = vld [vmem:[%s1958 + $0x10] sm:$0xf]
        %v1964 = vld [vmem:[%s1958 + $0x14] sm:$0xf]
        %v1965 = vld [vmem:[%s1958 + $0x18] sm:$0xf]
        %v1966 = vld [vmem:[%s1958 + $0x1c] sm:$0xf]
        %v1967 = vperm.slane %v1218, 5
        %v1976 = vunpack.c.l.b16 %v1959
        %v1977 = vunpack.c.l.b16 %v1960
        %v1978 = vunpack.c.l.b16 %v1961
        %v1979 = vunpack.c.l.b16 %v1962
        %v1980 = vunpack.c.l.b16 %v1963
        %v1981 = vunpack.c.l.b16 %v1964
        %v1982 = vunpack.c.l.b16 %v1965
        %v1983 = vunpack.c.l.b16 %v1966
        %v1984 = vpack.c.b16 %v1977, %v1976
        %v1985 = vpack.c.b16 %v1979, %v1978
        %v1986 = vpack.c.b16 %v1981, %v1980
        %v1987 = vpack.c.b16 %v1983, %v1982
        %v1993 = vsel %vm1145, %v1957, 0
        %1995 = vmatpush.bf16.msra.mxu0 0
        %1996 = vmatpush.bf16.msra.mxu0 0
        %1997 = vmatpush.bf16.msra.mxu0 0
        %1998 = vmatpush.bf16.msra.mxu0 0
        %1999 = vmatpush.bf16.msra.mxu0 %v1987
        %2000 = vmatpush.bf16.msra.mxu0 %v1986
        %2001 = vmatpush.bf16.msra.mxu0 %v1985
        %2002 = vmatpush.bf16.msra.mxu0 %v1984
        %2003 = vmatmul.bf16.gmra.mxu0 %v1993
        %v2004 = vpop.f32.mrf.mxu0
        %v2005 = vadd.f32 %v1967, %v2004
        %v2006 = vpop.f32.mrf.mxu0
        %v2007 = vadd.f32 %v1967, %v2006
        %2008 = vdwg.mxu0
        %v2009 = vadd.f32 %v2005, %v1565
        %v2010 = vadd.f32 %v2007, %v1566
        %v2011 = vsel %vm377, %v2009, 0.0
        %2012 = vadd.xlane.f32.xlu0 %v2011
        %v2013 = vpop.xlane.xlu0 %2012
        %v2014 = vsel %vm377, %v2010, 0.0
        %2015 = vadd.xlane.f32.xlu0 %v2014
        %v2016 = vpop.xlane.xlu0 %2015
        %v2017 = vmul.f32 %v2013, %v667
        %v2018 = vmul.f32 %v2016, %v667
        %v2019 = vsub.f32 %v2009, %v2017
        %v2020 = vsub.f32 %v2010, %v2018
        %v2021 = vmul.f32 %v2019, %v2019
        %v2022 = vmul.f32 %v2020, %v2020
        %v2023 = vsel %vm377, %v2021, 0.0
        %2024 = vadd.xlane.f32.xlu0 %v2023
        %v2025 = vpop.xlane.xlu0 %2024
        %v2026 = vsel %vm377, %v2022, 0.0
        %2027 = vadd.xlane.f32.xlu0 %v2026
        %v2028 = vpop.xlane.xlu0 %2027
        %v2029 = vmul.f32 %v2025, %v667
        %v2030 = vmul.f32 %v2028, %v667
        %v2031 = vadd.f32 %v2029, 1e-05
        %v2032 = vadd.f32 %v2030, 1e-05
        %v2033 = vrsqrt.pop %v2031
        %v2034 = vmul.f32 %v2033, %v2031
        %v2035 = vmul.f32 %v2034, %v2033
        %v2036 = vmul.f32 0.5, %v2035
        %v2037 = vsub.f32 1.5, %v2036
        %v2038 = vmul.f32 %v2033, %v2037
        %vm2039 = vweird.f32 %v2031
        %vm2040 = vweird.f32 %v2033
        %vm2041 = vmor %vm2039, %vm2040
        %v2042 = vsel %vm2041, %v2033, %v2038
        %v2043 = vrsqrt.pop %v2032
        %v2044 = vmul.f32 %v2043, %v2032
        %v2045 = vmul.f32 %v2044, %v2043
        %v2046 = vmul.f32 0.5, %v2045
        %v2047 = vsub.f32 1.5, %v2046
        %v2048 = vmul.f32 %v2043, %v2047
        %vm2049 = vweird.f32 %v2032
        %vm2050 = vweird.f32 %v2043
        %vm2051 = vmor %vm2049, %vm2050
        %v2052 = vsel %vm2051, %v2043, %v2048
        %v2053 = vmul.f32 %v2019, %v2042
        %v2054 = vmul.f32 %v2020, %v2052
        %v2055 = vperm.slane %v1218, 6
        %v2056 = vmul.f32 %v2053, %v2055
        %v2057 = vmul.f32 %v2054, %v2055
        %v2058 = vperm.slane %v1218, 7
        %v2059 = vadd.f32 %v2056, %v2058
        %v2060 = vadd.f32 %v2057, %v2058
        %v2061 = vmul.f32 %v2059, %v350
        %v2062 = vmul.f32 %v2060, %v351
        %2063 = vst.msk [vmem:[%s330] sm:$0xff] %vm377, %v2061
        %2064 = vst.msk [vmem:[%s330 + $0x8] sm:$0xff] %vm377, %v2062
        %s2065 = sand.u32 %s192, 1
        %s2066 = scalar_lea.sflag [#allocation6], %s2065
        %s2067 = sand.u32 %s192, 1
        %s2068 = smul.addr %s2067, 16
        %s2069 = scalar_lea.vmem [#allocation10], %s2068
        // Predicated region
        $region61: #{tpu_custom_call.1} parent=47 // pred_check
          %p2070 = pneg %p202
        $region62: #{tpu_custom_call.1} parent=47 // pred_check_branch
          %2072 = sbr.rel (%p2070) target = $region64
        $region63: #{tpu_custom_call.1} parent=47 // pred_region
          %2074 = vsyncadd %s2066, 0
          %s2075 = smul.addr %s32, 2
          %s2076 = smul.addr %s2075, 8
          %s2077 = scalar_lea.hbm %s8, %s2076
          %s2078 = sshll.u32 %s2069, 4
          %s2079 = int_to_ptr.vmem [resolvable:$true] %s2078
          %s2080 = sshll.u32 %s2077, 4
          %s2081 = int_to_ptr.hbm [resolvable:$true] %s2080
          %2086 = dma.vmem_to_hbm [thread:$0]  %s2079, 256, %s2081, %s2066, 128, 128, 8
        $region64: #{tpu_custom_call.1} parent=47 // pred_fallthru
          _
      $region48: #{tpu_custom_call.1} parent=5 // pred_fallthru
        _
      %p2087 = scmp.le.s32.totalorder 2, %s27
      // Predicated region
      $region65: #{tpu_custom_call.1} parent=5 // pred_check
        %p2088 = pneg %p2087
      $region66: #{tpu_custom_call.1} parent=5 // pred_check_branch
        %2090 = sbr.rel (%p2088) target = $region68
      $region67: #{tpu_custom_call.1} parent=5 // pred_region
        %s2091 = ssub.s32 %s27, 2
        // Predicated region
        $region69: #{tpu_custom_call.1} parent=67 // pred_check
          %p2092 = pneg %p208
        $region70: #{tpu_custom_call.1} parent=67 // pred_check_branch
          %2094 = sbr.rel (%p2092) target = $region72
        $region71: #{tpu_custom_call.1} parent=67 // pred_region
          %s2095 = sand.u32 %s193, 1
          %s2096 = scalar_lea.sflag [#allocation6], %s2095
          %s2097 = sand.u32 %s193, 1
          %s2098 = smul.addr %s2097, 16
          %s2099 = scalar_lea.vmem [#allocation10], %s2098
          %2101 = dma.done %s2096, 256
        $region72: #{tpu_custom_call.1} parent=67 // pred_fallthru
          _
      $region68: #{tpu_custom_call.1} parent=5 // pred_fallthru
        _
    $region6: #{tpu_custom_call.1} parent=1 // loop_footer
      %s31 = sadd.s32 1, %s27
    $region7: #{tpu_custom_call.1} parent=1 // loop_footer_branch
      %26 = sbr.rel target = $region3
    $region8: #{tpu_custom_call.1} parent=1 // loop_exit
      _
    %2102 = vsyncpa [#allocation5], 1
    %s2103 = scalar_lea.sflag [#allocation5], 1
    %2104 = vsyncpa %s2103, 1
    %2105 = vsyncpa [#allocation8], 1
    %2106 = vsyncpa [#allocation6], 1
    %s2107 = scalar_lea.sflag [#allocation6], 1
    %2108 = vsyncpa %s2107, 1

</llo_original>
